<compile_context>
chip_gen: v7x
topology: tpu7x:2x2x1
jax: 0.10.0
libtpu: 0.0.40
codegen_flags: <defaults>
</compile_context>

<pallas_src>
import math

import jax
import jax.numpy as jnp
import numpy as np
from jax import lax
from jax.experimental import pallas as pl
from jax.experimental.pallas import tpu as pltpu

# ---------------- model hyper-parameters (small, deterministic) ----------------
B = 2      # batch
S = 8      # sequence length
D = 32     # d_model (== EncoderLayer "size")
H = 4      # attention heads
DK = D // H
DFF = 64   # feed-forward hidden size
EPS = 1e-6
W3 = 3 * D  # fused QKV output width


# ------------------------------- Pallas kernel --------------------------------
def encoder_layer_kernel(x_ref, mb_ref, wqkv_ref, wo_ref, w1_ref, w2_ref, pv_ref,
                         o_ref, attn_scr):
    # x_ref: (bb*S, D) flattened activations for this batch block
    # mb_ref: (bb, 1, S) additive attention bias (0 or -1e9), precomputed on host
    # pv_ref: (8, 3D) packed small vectors:
    #   row 0: bq|bk|bv (fused), row 1: b1 (first DFF cols), row 2: bo, row 3: b2,
    #   rows 4-7: ln1_a, ln1_b, ln2_a, ln2_b (first D cols each)
    x = x_ref[...]                                    # (rows, D) f32
    mbias = mb_ref[...]                               # (bb, 1, S)
    rows = x.shape[0]
    bb = rows // S

    pv = pv_ref[...]
    bqkv = pv[0:1, :]                                 # (1, 3D)
    b1 = pv[1:2, :DFF]
    bo = pv[2:3, :D]
    b2 = pv[3:4, :D]
    ln1_a = pv[4:5, :D]
    ln1_b = pv[5:6, :D]
    ln2_a = pv[6:7, :D]
    ln2_b = pv[7:8, :D]

    def layer_norm(v, a, b):
        # torch LayerNorm module in the spec: unbiased std (n-1), divide by (std+eps)
        mean = jnp.mean(v, axis=-1, keepdims=True)
        var = jnp.sum((v - mean) ** 2, axis=-1, keepdims=True) * (1.0 / (D - 1))
        inv = pl.reciprocal(jnp.sqrt(var) + EPS, approx=True)   # EUP, not VALU divide
        return a * (v - mean) * inv + b

    # ---------------- sublayer 0: self-attention on LN1(x) ----------------
    xn = layer_norm(x, ln1_a, ln1_b)                                   # (rows, D)

    # fused QKV projection: one MXU push instead of three
    qkv = jnp.dot(xn, wqkv_ref[...], preferred_element_type=jnp.float32) + bqkv
    q = qkv[:, 0 * D:1 * D]
    k = qkv[:, 1 * D:2 * D]
    v = qkv[:, 2 * D:3 * D]

    scale = 1.0 / math.sqrt(DK)
    # static loops over (batch-in-block, heads); head outputs are assembled in VMEM
    # scratch so a single Wo matmul projects all heads (no lane-dim concatenate).
    for b in range(bb):
        r0 = b * S
        bias = mbias[b]                               # (1, S) additive mask bias
        for h in range(H):
            c0 = h * DK
            qh = q[r0:r0 + S, c0:c0 + DK]             # (S, DK)
            kh = k[r0:r0 + S, c0:c0 + DK]
            vh = v[r0:r0 + S, c0:c0 + DK]
            s_ = lax.dot_general(qh, kh, (((1,), (1,)), ((), ())),
                                 preferred_element_type=jnp.float32) * scale + bias
            m_ = jnp.max(s_, axis=-1, keepdims=True)
            e_ = jnp.exp(s_ - m_)
            p_ = e_ * pl.reciprocal(jnp.sum(e_, axis=-1, keepdims=True), approx=True)
            attn_scr[r0:r0 + S, c0:c0 + DK] = jnp.dot(
                p_, vh, preferred_element_type=jnp.float32)

    attn = jnp.dot(attn_scr[...], wo_ref[...],
                   preferred_element_type=jnp.float32) + bo

    # TODO(synk): dropout is a no-op here (inference / eval semantics)
    x1 = x + attn                                                       # residual

    # ---------------- sublayer 1: feed-forward on LN2(x1) ----------------
    xn2 = layer_norm(x1, ln2_a, ln2_b)
    h1 = jnp.maximum(
        jnp.dot(xn2, w1_ref[...], preferred_element_type=jnp.float32) + b1, 0.0)
    ff = jnp.dot(h1, w2_ref[...], preferred_element_type=jnp.float32) + b2

    o_ref[...] = (x1 + ff).astype(o_ref.dtype)


# ------------------------------- host wrapper ----------------------------------
def _pack_params(params):
    (wq, bq, wk, bk, wv, bv, wo, bo,
     ln1a, ln1b, w1, b1, w2, b2, ln2a, ln2b) = params
    wqkv = jnp.concatenate([wq, wk, wv], axis=1)          # (D, 3D)

    def row(vec):
        vec = vec.reshape(1, -1).astype(jnp.float32)
        return jnp.pad(vec, ((0, 0), (0, W3 - vec.shape[1])))

    pv = jnp.concatenate([
        row(jnp.concatenate([bq, bk, bv], axis=1)),       # fused QKV bias
        row(b1), row(bo), row(b2),
        row(ln1a), row(ln1b), row(ln2a), row(ln2b)], axis=0)   # (8, 3D)
    return wqkv, wo, w1, w2, pv


def _default_batch_block():
    try:
        kind = jax.devices()[0].device_kind.lower()
    except Exception:
        kind = ""
    # v7x has 2 TensorCores/chip: keep batch on the parallel grid so both get work.
    # Single-TC chips (v5e/v6e): collapse the whole batch into one grid step.
    return 1 if "7" in kind else B


def encoder_layer(x, mask, params, batch_block=None):
    """x: (B, S, D) f32, mask: (B, 1, S) f32. Returns (B, S, D) f32."""
    bb = _default_batch_block() if batch_block is None else batch_block
    assert B % bb == 0
    rows = bb * S

    wqkv, wo, w1, w2, pv = _pack_params(params)
    x2 = x.reshape(B * S, D)
    # additive attention bias computed once on the host (no compare in the kernel)
    mask_bias = jnp.where(mask == 0.0, -1e9, 0.0).astype(jnp.float32)   # (B, 1, S)

    full2d = lambda shape: pl.BlockSpec(shape, lambda b: (0, 0))
    out = pl.pallas_call(
        encoder_layer_kernel,
        out_shape=jax.ShapeDtypeStruct((B * S, D), jnp.float32),
        grid_spec=pltpu.PrefetchScalarGridSpec(
            num_scalar_prefetch=0,
            grid=(B // bb,),
            in_specs=[
                pl.BlockSpec((rows, D), lambda b: (b, 0)),       # activations
                pl.BlockSpec((bb, 1, S), lambda b: (b, 0, 0)),   # mask bias
                full2d((D, W3)),                                 # fused wqkv
                full2d((D, D)),                                  # wo
                full2d((D, DFF)),                                # w1
                full2d((DFF, D)),                                # w2
                full2d((8, W3)),                                 # packed vectors
            ],
            out_specs=pl.BlockSpec((rows, D), lambda b: (b, 0)),
            scratch_shapes=[pltpu.VMEM((rows, D), jnp.float32)],
        ),
        compiler_params=pltpu.CompilerParams(dimension_semantics=("parallel",)),
    )(x2, mask_bias, wqkv, wo, w1, w2, pv)
    return out.reshape(B, S, D)


# --------------------------- pure-JAX reference --------------------------------
def reference(x, mask, params):
    (wq, bq, wk, bk, wv, bv, wo, bo,
     ln1a, ln1b, w1, b1, w2, b2, ln2a, ln2b) = params

    def ln(v, a, b):
        mean = jnp.mean(v, axis=-1, keepdims=True)
        std = jnp.sqrt(jnp.sum((v - mean) ** 2, axis=-1, keepdims=True) / (D - 1))
        return a * (v - mean) / (std + EPS) + b

    xn = ln(x, ln1a, ln1b)
    q = xn @ wq + bq
    k = xn @ wk + bk
    v = xn @ wv + bv
    qh = q.reshape(B, S, H, DK).transpose(0, 2, 1, 3)
    kh = k.reshape(B, S, H, DK).transpose(0, 2, 1, 3)
    vh = v.reshape(B, S, H, DK).transpose(0, 2, 1, 3)
    scores = jnp.einsum('bhqd,bhkd->bhqk', qh, kh) / math.sqrt(DK)
    scores = jnp.where(mask[:, None, :, :] == 0, -1e9, scores)
    p = jax.nn.softmax(scores, axis=-1)
    attn = jnp.einsum('bhqk,bhkd->bhqd', p, vh).transpose(0, 2, 1, 3).reshape(B, S, D)
    x1 = x + (attn @ wo + bo)
    xn2 = ln(x1, ln2a, ln2b)
    return x1 + (jnp.maximum(xn2 @ w1 + b1, 0.0) @ w2 + b2)


# ----------------------------------- main ---------------------------------------
if __name__ == "__main__":
    key = jax.random.PRNGKey(0)
    keys = jax.random.split(key, 12)

    x = jax.random.normal(keys[0], (B, S, D), dtype=jnp.float32)
    # mask: batch 0 fully visible; batch 1 has the last two key positions masked out
    mask = jnp.ones((B, 1, S), dtype=jnp.float32)
    mask = mask.at[1, 0, S - 2:].set(0.0)

    scale = 0.1
    params = (
        jax.random.normal(keys[1], (D, D), jnp.float32) * scale,    # wq
        jax.random.normal(keys[2], (1, D), jnp.float32) * scale,    # bq
        jax.random.normal(keys[3], (D, D), jnp.float32) * scale,    # wk
        jax.random.normal(keys[4], (1, D), jnp.float32) * scale,    # bk
        jax.random.normal(keys[5], (D, D), jnp.float32) * scale,    # wv
        jax.random.normal(keys[6], (1, D), jnp.float32) * scale,    # bv
        jax.random.normal(keys[7], (D, D), jnp.float32) * scale,    # wo
        jax.random.normal(keys[8], (1, D), jnp.float32) * scale,    # bo
        jnp.ones((1, D), jnp.float32),                              # ln1 a_2
        jnp.zeros((1, D), jnp.float32),                             # ln1 b_2
        jax.random.normal(keys[9], (D, DFF), jnp.float32) * scale,  # w1
        jnp.zeros((1, DFF), jnp.float32),                           # b1
        jax.random.normal(keys[10], (DFF, D), jnp.float32) * scale, # w2
        jnp.zeros((1, D), jnp.float32),                             # b2
        jnp.ones((1, D), jnp.float32),                              # ln2 a_2
        jnp.zeros((1, D), jnp.float32),                             # ln2 b_2
    )

    out = jax.block_until_ready(encoder_layer(x, mask, params))
    ref = jax.block_until_ready(reference(x, mask, params))

    # slightly loose tolerance because softmax/LN use the EUP approximate reciprocal
    assert np.allclose(np.asarray(out), np.asarray(ref), atol=2e-3, rtol=2e-3)

    print("KERNEL_OK")
</pallas_src>

<mosaic_0001>
module attributes {stable_mosaic.version = 11 : i64} {
  func.func @encoder_layer_kernel(%arg0: i32, %arg1: memref<16x32xf32, #tpu.memory_space<vmem>>, %arg2: memref<2x1x8xf32, #tpu.memory_space<vmem>>, %arg3: memref<32x96xf32, #tpu.memory_space<vmem>>, %arg4: memref<32x32xf32, #tpu.memory_space<vmem>>, %arg5: memref<32x64xf32, #tpu.memory_space<vmem>>, %arg6: memref<64x32xf32, #tpu.memory_space<vmem>>, %arg7: memref<8x96xf32, #tpu.memory_space<vmem>>, %arg8: memref<16x32xf32, #tpu.memory_space<vmem>>, %arg9: memref<16x32xf32, #tpu.memory_space<vmem>>) attributes {dimension_semantics = [#tpu.dimension_semantics<parallel>], iteration_bounds = array<i64: 1>, scalar_prefetch = 0 : i64, scratch_operands = 1 : i64, tpu.core_type = #tpu.core_type<tc>, window_params = [{transform_indices = @transform_0, window_bounds = array<i64: 16, 32>}, {transform_indices = @transform_1, window_bounds = array<i64: 2, 1, 8>}, {pipeline_mode = #tpu.pipeline_mode<synchronous>, transform_indices = @transform_2, window_bounds = array<i64: 32, 96>}, {pipeline_mode = #tpu.pipeline_mode<synchronous>, transform_indices = @transform_3, window_bounds = array<i64: 32, 32>}, {pipeline_mode = #tpu.pipeline_mode<synchronous>, transform_indices = @transform_4, window_bounds = array<i64: 32, 64>}, {pipeline_mode = #tpu.pipeline_mode<synchronous>, transform_indices = @transform_5, window_bounds = array<i64: 64, 32>}, {pipeline_mode = #tpu.pipeline_mode<synchronous>, transform_indices = @transform_6, window_bounds = array<i64: 8, 96>}, {transform_indices = @transform_7, window_bounds = array<i64: 16, 32>}]} {
    %c0 = arith.constant 0 : index
    %c0_0 = arith.constant 0 : index
    %0 = vector.load %arg1[%c0, %c0_0] : memref<16x32xf32, #tpu.memory_space<vmem>>, vector<16x32xf32>
    %c0_1 = arith.constant 0 : index
    %c0_2 = arith.constant 0 : index
    %c0_3 = arith.constant 0 : index
    %1 = vector.load %arg2[%c0_1, %c0_2, %c0_3] : memref<2x1x8xf32, #tpu.memory_space<vmem>>, vector<2x1x8xf32>
    %c0_4 = arith.constant 0 : index
    %c0_5 = arith.constant 0 : index
    %2 = vector.load %arg7[%c0_4, %c0_5] : memref<8x96xf32, #tpu.memory_space<vmem>>, vector<8x96xf32>
    %3 = vector.extract_strided_slice %2 {offsets = [0, 0], sizes = [1, 96], strides = [1, 1]} : vector<8x96xf32> to vector<1x96xf32>
    %4 = vector.extract_strided_slice %2 {offsets = [1, 0], sizes = [1, 64], strides = [1, 1]} : vector<8x96xf32> to vector<1x64xf32>
    %5 = vector.extract_strided_slice %2 {offsets = [2, 0], sizes = [1, 32], strides = [1, 1]} : vector<8x96xf32> to vector<1x32xf32>
    %6 = vector.extract_strided_slice %2 {offsets = [3, 0], sizes = [1, 32], strides = [1, 1]} : vector<8x96xf32> to vector<1x32xf32>
    %7 = vector.extract_strided_slice %2 {offsets = [4, 0], sizes = [1, 32], strides = [1, 1]} : vector<8x96xf32> to vector<1x32xf32>
    %8 = vector.extract_strided_slice %2 {offsets = [5, 0], sizes = [1, 32], strides = [1, 1]} : vector<8x96xf32> to vector<1x32xf32>
    %9 = vector.extract_strided_slice %2 {offsets = [6, 0], sizes = [1, 32], strides = [1, 1]} : vector<8x96xf32> to vector<1x32xf32>
    %10 = vector.extract_strided_slice %2 {offsets = [7, 0], sizes = [1, 32], strides = [1, 1]} : vector<8x96xf32> to vector<1x32xf32>
    %cst = arith.constant dense<0.000000e+00> : vector<16xf32>
    %11 = vector.multi_reduction <add>, %0, %cst [1] : vector<16x32xf32> to vector<16xf32>
    %12 = vector.shape_cast %11 : vector<16xf32> to vector<16x1xf32>
    %cst_6 = arith.constant 3.200000e+01 : f32
    %13 = vector.broadcast %cst_6 : f32 to vector<16x1xf32>
    %14 = arith.divf %12, %13 : vector<16x1xf32>
    %15 = vector.broadcast %14 : vector<16x1xf32> to vector<16x32xf32>
    %16 = arith.subf %0, %15 : vector<16x32xf32>
    %17 = arith.mulf %16, %16 : vector<16x32xf32>
    %cst_7 = arith.constant dense<0.000000e+00> : vector<16xf32>
    %18 = vector.multi_reduction <add>, %17, %cst_7 [1] : vector<16x32xf32> to vector<16xf32>
    %19 = vector.shape_cast %18 : vector<16xf32> to vector<16x1xf32>
    %cst_8 = arith.constant 0.0322580636 : f32
    %20 = vector.broadcast %cst_8 : f32 to vector<16x1xf32>
    %21 = arith.mulf %19, %20 : vector<16x1xf32>
    %22 = math.sqrt %21 : vector<16x1xf32>
    %cst_9 = arith.constant 9.99999997E-7 : f32
    %23 = vector.broadcast %cst_9 : f32 to vector<16x1xf32>
    %24 = arith.addf %22, %23 : vector<16x1xf32>
    %25 = tpu.reciprocal %24 {approx = true} : vector<16x1xf32> -> vector<16x1xf32>
    %26 = vector.broadcast %14 : vector<16x1xf32> to vector<16x32xf32>
    %27 = arith.subf %0, %26 : vector<16x32xf32>
    %28 = vector.broadcast %7 : vector<1x32xf32> to vector<16x32xf32>
    %29 = arith.mulf %28, %27 : vector<16x32xf32>
    %30 = vector.broadcast %25 : vector<16x1xf32> to vector<16x32xf32>
    %31 = arith.mulf %29, %30 : vector<16x32xf32>
    %32 = vector.broadcast %8 : vector<1x32xf32> to vector<16x32xf32>
    %33 = arith.addf %31, %32 : vector<16x32xf32>
    %c0_10 = arith.constant 0 : index
    %c0_11 = arith.constant 0 : index
    %34 = vector.load %arg3[%c0_10, %c0_11] : memref<32x96xf32, #tpu.memory_space<vmem>>, vector<32x96xf32>
    %cst_12 = arith.constant dense<0.000000e+00> : vector<16x96xf32>
    %35 = tpu.matmul %33, %34, %cst_12 {dimension_numbers = #tpu.dot_dimension_numbers<[1], [0], [0], [1], [0, 0, 1, 1], [], []>} : vector<16x32xf32>, vector<32x96xf32>, vector<16x96xf32> -> vector<16x96xf32>
    %36 = vector.broadcast %3 : vector<1x96xf32> to vector<16x96xf32>
    %37 = arith.addf %35, %36 : vector<16x96xf32>
    %38 = vector.extract_strided_slice %37 {offsets = [0, 0], sizes = [16, 32], strides = [1, 1]} : vector<16x96xf32> to vector<16x32xf32>
    %39 = vector.extract_strided_slice %37 {offsets = [0, 32], sizes = [16, 32], strides = [1, 1]} : vector<16x96xf32> to vector<16x32xf32>
    %40 = vector.extract_strided_slice %37 {offsets = [0, 64], sizes = [16, 32], strides = [1, 1]} : vector<16x96xf32> to vector<16x32xf32>
    %41 = vector.extract_strided_slice %1 {offsets = [0, 0, 0], sizes = [1, 1, 8], strides = [1, 1, 1]} : vector<2x1x8xf32> to vector<1x1x8xf32>
    %42 = vector.shape_cast %41 : vector<1x1x8xf32> to vector<1x8xf32>
    %43 = vector.extract_strided_slice %38 {offsets = [0, 0], sizes = [8, 8], strides = [1, 1]} : vector<16x32xf32> to vector<8x8xf32>
    %44 = vector.extract_strided_slice %39 {offsets = [0, 0], sizes = [8, 8], strides = [1, 1]} : vector<16x32xf32> to vector<8x8xf32>
    %45 = vector.extract_strided_slice %40 {offsets = [0, 0], sizes = [8, 8], strides = [1, 1]} : vector<16x32xf32> to vector<8x8xf32>
    %cst_13 = arith.constant dense<0.000000e+00> : vector<8x8xf32>
    %46 = tpu.matmul %43, %44, %cst_13 {dimension_numbers = #tpu.dot_dimension_numbers<[1], [1], [0], [0], [0, 0, 1, 0], [], []>} : vector<8x8xf32>, vector<8x8xf32>, vector<8x8xf32> -> vector<8x8xf32>
    %cst_14 = arith.constant 0.353553385 : f32
    %47 = vector.broadcast %cst_14 : f32 to vector<8x8xf32>
    %48 = arith.mulf %46, %47 : vector<8x8xf32>
    %49 = vector.broadcast %42 : vector<1x8xf32> to vector<8x8xf32>
    %50 = arith.addf %48, %49 : vector<8x8xf32>
    %cst_15 = arith.constant dense<0xFF800000> : vector<8xf32>
    %51 = vector.multi_reduction <maximumf>, %50, %cst_15 [1] : vector<8x8xf32> to vector<8xf32>
    %52 = vector.shape_cast %51 : vector<8xf32> to vector<8x1xf32>
    %53 = vector.broadcast %52 : vector<8x1xf32> to vector<8x8xf32>
    %54 = arith.subf %50, %53 : vector<8x8xf32>
    %55 = math.exp %54 : vector<8x8xf32>
    %cst_16 = arith.constant dense<0.000000e+00> : vector<8xf32>
    %56 = vector.multi_reduction <add>, %55, %cst_16 [1] : vector<8x8xf32> to vector<8xf32>
    %57 = vector.shape_cast %56 : vector<8xf32> to vector<8x1xf32>
    %58 = tpu.reciprocal %57 {approx = true} : vector<8x1xf32> -> vector<8x1xf32>
    %59 = vector.broadcast %58 : vector<8x1xf32> to vector<8x8xf32>
    %60 = arith.mulf %55, %59 : vector<8x8xf32>
    %cst_17 = arith.constant dense<0.000000e+00> : vector<8x8xf32>
    %61 = tpu.matmul %60, %45, %cst_17 {dimension_numbers = #tpu.dot_dimension_numbers<[1], [0], [0], [1], [0, 0, 1, 1], [], []>} : vector<8x8xf32>, vector<8x8xf32>, vector<8x8xf32> -> vector<8x8xf32>
    %c0_18 = arith.constant 0 : index
    %c0_19 = arith.constant 0 : index
    %62 = vector.load %arg9[%c0_18, %c0_19] : memref<16x32xf32, #tpu.memory_space<vmem>>, vector<8x8xf32>
    tpu.vector_store %arg9[%c0_18, %c0_19], %61 {strides = array<i32>} : memref<16x32xf32, #tpu.memory_space<vmem>>, vector<8x8xf32>,
    %63 = vector.extract_strided_slice %38 {offsets = [0, 8], sizes = [8, 8], strides = [1, 1]} : vector<16x32xf32> to vector<8x8xf32>
    %64 = vector.extract_strided_slice %39 {offsets = [0, 8], sizes = [8, 8], strides = [1, 1]} : vector<16x32xf32> to vector<8x8xf32>
    %65 = vector.extract_strided_slice %40 {offsets = [0, 8], sizes = [8, 8], strides = [1, 1]} : vector<16x32xf32> to vector<8x8xf32>
    %cst_20 = arith.constant dense<0.000000e+00> : vector<8x8xf32>
    %66 = tpu.matmul %63, %64, %cst_20 {dimension_numbers = #tpu.dot_dimension_numbers<[1], [1], [0], [0], [0, 0, 1, 0], [], []>} : vector<8x8xf32>, vector<8x8xf32>, vector<8x8xf32> -> vector<8x8xf32>
    %cst_21 = arith.constant 0.353553385 : f32
    %67 = vector.broadcast %cst_21 : f32 to vector<8x8xf32>
    %68 = arith.mulf %66, %67 : vector<8x8xf32>
    %69 = vector.broadcast %42 : vector<1x8xf32> to vector<8x8xf32>
    %70 = arith.addf %68, %69 : vector<8x8xf32>
    %cst_22 = arith.constant dense<0xFF800000> : vector<8xf32>
    %71 = vector.multi_reduction <maximumf>, %70, %cst_22 [1] : vector<8x8xf32> to vector<8xf32>
    %72 = vector.shape_cast %71 : vector<8xf32> to vector<8x1xf32>
    %73 = vector.broadcast %72 : vector<8x1xf32> to vector<8x8xf32>
    %74 = arith.subf %70, %73 : vector<8x8xf32>
    %75 = math.exp %74 : vector<8x8xf32>
    %cst_23 = arith.constant dense<0.000000e+00> : vector<8xf32>
    %76 = vector.multi_reduction <add>, %75, %cst_23 [1] : vector<8x8xf32> to vector<8xf32>
    %77 = vector.shape_cast %76 : vector<8xf32> to vector<8x1xf32>
    %78 = tpu.reciprocal %77 {approx = true} : vector<8x1xf32> -> vector<8x1xf32>
    %79 = vector.broadcast %78 : vector<8x1xf32> to vector<8x8xf32>
    %80 = arith.mulf %75, %79 : vector<8x8xf32>
    %cst_24 = arith.constant dense<0.000000e+00> : vector<8x8xf32>
    %81 = tpu.matmul %80, %65, %cst_24 {dimension_numbers = #tpu.dot_dimension_numbers<[1], [0], [0], [1], [0, 0, 1, 1], [], []>} : vector<8x8xf32>, vector<8x8xf32>, vector<8x8xf32> -> vector<8x8xf32>
    %c0_25 = arith.constant 0 : index
    %c8 = arith.constant 8 : index
    %82 = vector.load %arg9[%c0_25, %c8] : memref<16x32xf32, #tpu.memory_space<vmem>>, vector<8x8xf32>
    tpu.vector_store %arg9[%c0_25, %c8], %81 {strides = array<i32>} : memref<16x32xf32, #tpu.memory_space<vmem>>, vector<8x8xf32>,
    %83 = vector.extract_strided_slice %38 {offsets = [0, 16], sizes = [8, 8], strides = [1, 1]} : vector<16x32xf32> to vector<8x8xf32>
    %84 = vector.extract_strided_slice %39 {offsets = [0, 16], sizes = [8, 8], strides = [1, 1]} : vector<16x32xf32> to vector<8x8xf32>
    %85 = vector.extract_strided_slice %40 {offsets = [0, 16], sizes = [8, 8], strides = [1, 1]} : vector<16x32xf32> to vector<8x8xf32>
    %cst_26 = arith.constant dense<0.000000e+00> : vector<8x8xf32>
    %86 = tpu.matmul %83, %84, %cst_26 {dimension_numbers = #tpu.dot_dimension_numbers<[1], [1], [0], [0], [0, 0, 1, 0], [], []>} : vector<8x8xf32>, vector<8x8xf32>, vector<8x8xf32> -> vector<8x8xf32>
    %cst_27 = arith.constant 0.353553385 : f32
    %87 = vector.broadcast %cst_27 : f32 to vector<8x8xf32>
    %88 = arith.mulf %86, %87 : vector<8x8xf32>
    %89 = vector.broadcast %42 : vector<1x8xf32> to vector<8x8xf32>
    %90 = arith.addf %88, %89 : vector<8x8xf32>
    %cst_28 = arith.constant dense<0xFF800000> : vector<8xf32>
    %91 = vector.multi_reduction <maximumf>, %90, %cst_28 [1] : vector<8x8xf32> to vector<8xf32>
    %92 = vector.shape_cast %91 : vector<8xf32> to vector<8x1xf32>
    %93 = vector.broadcast %92 : vector<8x1xf32> to vector<8x8xf32>
    %94 = arith.subf %90, %93 : vector<8x8xf32>
    %95 = math.exp %94 : vector<8x8xf32>
    %cst_29 = arith.constant dense<0.000000e+00> : vector<8xf32>
    %96 = vector.multi_reduction <add>, %95, %cst_29 [1] : vector<8x8xf32> to vector<8xf32>
    %97 = vector.shape_cast %96 : vector<8xf32> to vector<8x1xf32>
    %98 = tpu.reciprocal %97 {approx = true} : vector<8x1xf32> -> vector<8x1xf32>
    %99 = vector.broadcast %98 : vector<8x1xf32> to vector<8x8xf32>
    %100 = arith.mulf %95, %99 : vector<8x8xf32>
    %cst_30 = arith.constant dense<0.000000e+00> : vector<8x8xf32>
    %101 = tpu.matmul %100, %85, %cst_30 {dimension_numbers = #tpu.dot_dimension_numbers<[1], [0], [0], [1], [0, 0, 1, 1], [], []>} : vector<8x8xf32>, vector<8x8xf32>, vector<8x8xf32> -> vector<8x8xf32>
    %c0_31 = arith.constant 0 : index
    %c16 = arith.constant 16 : index
    %102 = vector.load %arg9[%c0_31, %c16] : memref<16x32xf32, #tpu.memory_space<vmem>>, vector<8x8xf32>
    tpu.vector_store %arg9[%c0_31, %c16], %101 {strides = array<i32>} : memref<16x32xf32, #tpu.memory_space<vmem>>, vector<8x8xf32>,
    %103 = vector.extract_strided_slice %38 {offsets = [0, 24], sizes = [8, 8], strides = [1, 1]} : vector<16x32xf32> to vector<8x8xf32>
    %104 = vector.extract_strided_slice %39 {offsets = [0, 24], sizes = [8, 8], strides = [1, 1]} : vector<16x32xf32> to vector<8x8xf32>
    %105 = vector.extract_strided_slice %40 {offsets = [0, 24], sizes = [8, 8], strides = [1, 1]} : vector<16x32xf32> to vector<8x8xf32>
    %cst_32 = arith.constant dense<0.000000e+00> : vector<8x8xf32>
    %106 = tpu.matmul %103, %104, %cst_32 {dimension_numbers = #tpu.dot_dimension_numbers<[1], [1], [0], [0], [0, 0, 1, 0], [], []>} : vector<8x8xf32>, vector<8x8xf32>, vector<8x8xf32> -> vector<8x8xf32>
    %cst_33 = arith.constant 0.353553385 : f32
    %107 = vector.broadcast %cst_33 : f32 to vector<8x8xf32>
    %108 = arith.mulf %106, %107 : vector<8x8xf32>
    %109 = vector.broadcast %42 : vector<1x8xf32> to vector<8x8xf32>
    %110 = arith.addf %108, %109 : vector<8x8xf32>
    %cst_34 = arith.constant dense<0xFF800000> : vector<8xf32>
    %111 = vector.multi_reduction <maximumf>, %110, %cst_34 [1] : vector<8x8xf32> to vector<8xf32>
    %112 = vector.shape_cast %111 : vector<8xf32> to vector<8x1xf32>
    %113 = vector.broadcast %112 : vector<8x1xf32> to vector<8x8xf32>
    %114 = arith.subf %110, %113 : vector<8x8xf32>
    %115 = math.exp %114 : vector<8x8xf32>
    %cst_35 = arith.constant dense<0.000000e+00> : vector<8xf32>
    %116 = vector.multi_reduction <add>, %115, %cst_35 [1] : vector<8x8xf32> to vector<8xf32>
    %117 = vector.shape_cast %116 : vector<8xf32> to vector<8x1xf32>
    %118 = tpu.reciprocal %117 {approx = true} : vector<8x1xf32> -> vector<8x1xf32>
    %119 = vector.broadcast %118 : vector<8x1xf32> to vector<8x8xf32>
    %120 = arith.mulf %115, %119 : vector<8x8xf32>
    %cst_36 = arith.constant dense<0.000000e+00> : vector<8x8xf32>
    %121 = tpu.matmul %120, %105, %cst_36 {dimension_numbers = #tpu.dot_dimension_numbers<[1], [0], [0], [1], [0, 0, 1, 1], [], []>} : vector<8x8xf32>, vector<8x8xf32>, vector<8x8xf32> -> vector<8x8xf32>
    %c0_37 = arith.constant 0 : index
    %c24 = arith.constant 24 : index
    %122 = vector.load %arg9[%c0_37, %c24] : memref<16x32xf32, #tpu.memory_space<vmem>>, vector<8x8xf32>
    tpu.vector_store %arg9[%c0_37, %c24], %121 {strides = array<i32>} : memref<16x32xf32, #tpu.memory_space<vmem>>, vector<8x8xf32>,
    %123 = vector.extract_strided_slice %1 {offsets = [1, 0, 0], sizes = [1, 1, 8], strides = [1, 1, 1]} : vector<2x1x8xf32> to vector<1x1x8xf32>
    %124 = vector.shape_cast %123 : vector<1x1x8xf32> to vector<1x8xf32>
    %125 = vector.extract_strided_slice %38 {offsets = [8, 0], sizes = [8, 8], strides = [1, 1]} : vector<16x32xf32> to vector<8x8xf32>
    %126 = vector.extract_strided_slice %39 {offsets = [8, 0], sizes = [8, 8], strides = [1, 1]} : vector<16x32xf32> to vector<8x8xf32>
    %127 = vector.extract_strided_slice %40 {offsets = [8, 0], sizes = [8, 8], strides = [1, 1]} : vector<16x32xf32> to vector<8x8xf32>
    %cst_38 = arith.constant dense<0.000000e+00> : vector<8x8xf32>
    %128 = tpu.matmul %125, %126, %cst_38 {dimension_numbers = #tpu.dot_dimension_numbers<[1], [1], [0], [0], [0, 0, 1, 0], [], []>} : vector<8x8xf32>, vector<8x8xf32>, vector<8x8xf32> -> vector<8x8xf32>
    %cst_39 = arith.constant 0.353553385 : f32
    %129 = vector.broadcast %cst_39 : f32 to vector<8x8xf32>
    %130 = arith.mulf %128, %129 : vector<8x8xf32>
    %131 = vector.broadcast %124 : vector<1x8xf32> to vector<8x8xf32>
    %132 = arith.addf %130, %131 : vector<8x8xf32>
    %cst_40 = arith.constant dense<0xFF800000> : vector<8xf32>
    %133 = vector.multi_reduction <maximumf>, %132, %cst_40 [1] : vector<8x8xf32> to vector<8xf32>
    %134 = vector.shape_cast %133 : vector<8xf32> to vector<8x1xf32>
    %135 = vector.broadcast %134 : vector<8x1xf32> to vector<8x8xf32>
    %136 = arith.subf %132, %135 : vector<8x8xf32>
    %137 = math.exp %136 : vector<8x8xf32>
    %cst_41 = arith.constant dense<0.000000e+00> : vector<8xf32>
    %138 = vector.multi_reduction <add>, %137, %cst_41 [1] : vector<8x8xf32> to vector<8xf32>
    %139 = vector.shape_cast %138 : vector<8xf32> to vector<8x1xf32>
    %140 = tpu.reciprocal %139 {approx = true} : vector<8x1xf32> -> vector<8x1xf32>
    %141 = vector.broadcast %140 : vector<8x1xf32> to vector<8x8xf32>
    %142 = arith.mulf %137, %141 : vector<8x8xf32>
    %cst_42 = arith.constant dense<0.000000e+00> : vector<8x8xf32>
    %143 = tpu.matmul %142, %127, %cst_42 {dimension_numbers = #tpu.dot_dimension_numbers<[1], [0], [0], [1], [0, 0, 1, 1], [], []>} : vector<8x8xf32>, vector<8x8xf32>, vector<8x8xf32> -> vector<8x8xf32>
    %c8_43 = arith.constant 8 : index
    %c0_44 = arith.constant 0 : index
    %144 = vector.load %arg9[%c8_43, %c0_44] : memref<16x32xf32, #tpu.memory_space<vmem>>, vector<8x8xf32>
    tpu.vector_store %arg9[%c8_43, %c0_44], %143 {strides = array<i32>} : memref<16x32xf32, #tpu.memory_space<vmem>>, vector<8x8xf32>,
    %145 = vector.extract_strided_slice %38 {offsets = [8, 8], sizes = [8, 8], strides = [1, 1]} : vector<16x32xf32> to vector<8x8xf32>
    %146 = vector.extract_strided_slice %39 {offsets = [8, 8], sizes = [8, 8], strides = [1, 1]} : vector<16x32xf32> to vector<8x8xf32>
    %147 = vector.extract_strided_slice %40 {offsets = [8, 8], sizes = [8, 8], strides = [1, 1]} : vector<16x32xf32> to vector<8x8xf32>
    %cst_45 = arith.constant dense<0.000000e+00> : vector<8x8xf32>
    %148 = tpu.matmul %145, %146, %cst_45 {dimension_numbers = #tpu.dot_dimension_numbers<[1], [1], [0], [0], [0, 0, 1, 0], [], []>} : vector<8x8xf32>, vector<8x8xf32>, vector<8x8xf32> -> vector<8x8xf32>
    %cst_46 = arith.constant 0.353553385 : f32
    %149 = vector.broadcast %cst_46 : f32 to vector<8x8xf32>
    %150 = arith.mulf %148, %149 : vector<8x8xf32>
    %151 = vector.broadcast %124 : vector<1x8xf32> to vector<8x8xf32>
    %152 = arith.addf %150, %151 : vector<8x8xf32>
    %cst_47 = arith.constant dense<0xFF800000> : vector<8xf32>
    %153 = vector.multi_reduction <maximumf>, %152, %cst_47 [1] : vector<8x8xf32> to vector<8xf32>
    %154 = vector.shape_cast %153 : vector<8xf32> to vector<8x1xf32>
    %155 = vector.broadcast %154 : vector<8x1xf32> to vector<8x8xf32>
    %156 = arith.subf %152, %155 : vector<8x8xf32>
    %157 = math.exp %156 : vector<8x8xf32>
    %cst_48 = arith.constant dense<0.000000e+00> : vector<8xf32>
    %158 = vector.multi_reduction <add>, %157, %cst_48 [1] : vector<8x8xf32> to vector<8xf32>
    %159 = vector.shape_cast %158 : vector<8xf32> to vector<8x1xf32>
    %160 = tpu.reciprocal %159 {approx = true} : vector<8x1xf32> -> vector<8x1xf32>
    %161 = vector.broadcast %160 : vector<8x1xf32> to vector<8x8xf32>
    %162 = arith.mulf %157, %161 : vector<8x8xf32>
    %cst_49 = arith.constant dense<0.000000e+00> : vector<8x8xf32>
    %163 = tpu.matmul %162, %147, %cst_49 {dimension_numbers = #tpu.dot_dimension_numbers<[1], [0], [0], [1], [0, 0, 1, 1], [], []>} : vector<8x8xf32>, vector<8x8xf32>, vector<8x8xf32> -> vector<8x8xf32>
    %c8_50 = arith.constant 8 : index
    %c8_51 = arith.constant 8 : index
    %164 = vector.load %arg9[%c8_50, %c8_51] : memref<16x32xf32, #tpu.memory_space<vmem>>, vector<8x8xf32>
    tpu.vector_store %arg9[%c8_50, %c8_51], %163 {strides = array<i32>} : memref<16x32xf32, #tpu.memory_space<vmem>>, vector<8x8xf32>,
    %165 = vector.extract_strided_slice %38 {offsets = [8, 16], sizes = [8, 8], strides = [1, 1]} : vector<16x32xf32> to vector<8x8xf32>
    %166 = vector.extract_strided_slice %39 {offsets = [8, 16], sizes = [8, 8], strides = [1, 1]} : vector<16x32xf32> to vector<8x8xf32>
    %167 = vector.extract_strided_slice %40 {offsets = [8, 16], sizes = [8, 8], strides = [1, 1]} : vector<16x32xf32> to vector<8x8xf32>
    %cst_52 = arith.constant dense<0.000000e+00> : vector<8x8xf32>
    %168 = tpu.matmul %165, %166, %cst_52 {dimension_numbers = #tpu.dot_dimension_numbers<[1], [1], [0], [0], [0, 0, 1, 0], [], []>} : vector<8x8xf32>, vector<8x8xf32>, vector<8x8xf32> -> vector<8x8xf32>
    %cst_53 = arith.constant 0.353553385 : f32
    %169 = vector.broadcast %cst_53 : f32 to vector<8x8xf32>
    %170 = arith.mulf %168, %169 : vector<8x8xf32>
    %171 = vector.broadcast %124 : vector<1x8xf32> to vector<8x8xf32>
    %172 = arith.addf %170, %171 : vector<8x8xf32>
    %cst_54 = arith.constant dense<0xFF800000> : vector<8xf32>
    %173 = vector.multi_reduction <maximumf>, %172, %cst_54 [1] : vector<8x8xf32> to vector<8xf32>
    %174 = vector.shape_cast %173 : vector<8xf32> to vector<8x1xf32>
    %175 = vector.broadcast %174 : vector<8x1xf32> to vector<8x8xf32>
    %176 = arith.subf %172, %175 : vector<8x8xf32>
    %177 = math.exp %176 : vector<8x8xf32>
    %cst_55 = arith.constant dense<0.000000e+00> : vector<8xf32>
    %178 = vector.multi_reduction <add>, %177, %cst_55 [1] : vector<8x8xf32> to vector<8xf32>
    %179 = vector.shape_cast %178 : vector<8xf32> to vector<8x1xf32>
    %180 = tpu.reciprocal %179 {approx = true} : vector<8x1xf32> -> vector<8x1xf32>
    %181 = vector.broadcast %180 : vector<8x1xf32> to vector<8x8xf32>
    %182 = arith.mulf %177, %181 : vector<8x8xf32>
    %cst_56 = arith.constant dense<0.000000e+00> : vector<8x8xf32>
    %183 = tpu.matmul %182, %167, %cst_56 {dimension_numbers = #tpu.dot_dimension_numbers<[1], [0], [0], [1], [0, 0, 1, 1], [], []>} : vector<8x8xf32>, vector<8x8xf32>, vector<8x8xf32> -> vector<8x8xf32>
    %c8_57 = arith.constant 8 : index
    %c16_58 = arith.constant 16 : index
    %184 = vector.load %arg9[%c8_57, %c16_58] : memref<16x32xf32, #tpu.memory_space<vmem>>, vector<8x8xf32>
    tpu.vector_store %arg9[%c8_57, %c16_58], %183 {strides = array<i32>} : memref<16x32xf32, #tpu.memory_space<vmem>>, vector<8x8xf32>,
    %185 = vector.extract_strided_slice %38 {offsets = [8, 24], sizes = [8, 8], strides = [1, 1]} : vector<16x32xf32> to vector<8x8xf32>
    %186 = vector.extract_strided_slice %39 {offsets = [8, 24], sizes = [8, 8], strides = [1, 1]} : vector<16x32xf32> to vector<8x8xf32>
    %187 = vector.extract_strided_slice %40 {offsets = [8, 24], sizes = [8, 8], strides = [1, 1]} : vector<16x32xf32> to vector<8x8xf32>
    %cst_59 = arith.constant dense<0.000000e+00> : vector<8x8xf32>
    %188 = tpu.matmul %185, %186, %cst_59 {dimension_numbers = #tpu.dot_dimension_numbers<[1], [1], [0], [0], [0, 0, 1, 0], [], []>} : vector<8x8xf32>, vector<8x8xf32>, vector<8x8xf32> -> vector<8x8xf32>
    %cst_60 = arith.constant 0.353553385 : f32
    %189 = vector.broadcast %cst_60 : f32 to vector<8x8xf32>
    %190 = arith.mulf %188, %189 : vector<8x8xf32>
    %191 = vector.broadcast %124 : vector<1x8xf32> to vector<8x8xf32>
    %192 = arith.addf %190, %191 : vector<8x8xf32>
    %cst_61 = arith.constant dense<0xFF800000> : vector<8xf32>
    %193 = vector.multi_reduction <maximumf>, %192, %cst_61 [1] : vector<8x8xf32> to vector<8xf32>
    %194 = vector.shape_cast %193 : vector<8xf32> to vector<8x1xf32>
    %195 = vector.broadcast %194 : vector<8x1xf32> to vector<8x8xf32>
    %196 = arith.subf %192, %195 : vector<8x8xf32>
    %197 = math.exp %196 : vector<8x8xf32>
    %cst_62 = arith.constant dense<0.000000e+00> : vector<8xf32>
    %198 = vector.multi_reduction <add>, %197, %cst_62 [1] : vector<8x8xf32> to vector<8xf32>
    %199 = vector.shape_cast %198 : vector<8xf32> to vector<8x1xf32>
    %200 = tpu.reciprocal %199 {approx = true} : vector<8x1xf32> -> vector<8x1xf32>
    %201 = vector.broadcast %200 : vector<8x1xf32> to vector<8x8xf32>
    %202 = arith.mulf %197, %201 : vector<8x8xf32>
    %cst_63 = arith.constant dense<0.000000e+00> : vector<8x8xf32>
    %203 = tpu.matmul %202, %187, %cst_63 {dimension_numbers = #tpu.dot_dimension_numbers<[1], [0], [0], [1], [0, 0, 1, 1], [], []>} : vector<8x8xf32>, vector<8x8xf32>, vector<8x8xf32> -> vector<8x8xf32>
    %c8_64 = arith.constant 8 : index
    %c24_65 = arith.constant 24 : index
    %204 = vector.load %arg9[%c8_64, %c24_65] : memref<16x32xf32, #tpu.memory_space<vmem>>, vector<8x8xf32>
    tpu.vector_store %arg9[%c8_64, %c24_65], %203 {strides = array<i32>} : memref<16x32xf32, #tpu.memory_space<vmem>>, vector<8x8xf32>,
    %c0_66 = arith.constant 0 : index
    %c0_67 = arith.constant 0 : index
    %205 = vector.load %arg9[%c0_66, %c0_67] : memref<16x32xf32, #tpu.memory_space<vmem>>, vector<16x32xf32>
    %c0_68 = arith.constant 0 : index
    %c0_69 = arith.constant 0 : index
    %206 = vector.load %arg4[%c0_68, %c0_69] : memref<32x32xf32, #tpu.memory_space<vmem>>, vector<32x32xf32>
    %cst_70 = arith.constant dense<0.000000e+00> : vector<16x32xf32>
    %207 = tpu.matmul %205, %206, %cst_70 {dimension_numbers = #tpu.dot_dimension_numbers<[1], [0], [0], [1], [0, 0, 1, 1], [], []>} : vector<16x32xf32>, vector<32x32xf32>, vector<16x32xf32> -> vector<16x32xf32>
    %208 = vector.broadcast %5 : vector<1x32xf32> to vector<16x32xf32>
    %209 = arith.addf %207, %208 : vector<16x32xf32>
    %210 = arith.addf %0, %209 : vector<16x32xf32>
    %cst_71 = arith.constant dense<0.000000e+00> : vector<16xf32>
    %211 = vector.multi_reduction <add>, %210, %cst_71 [1] : vector<16x32xf32> to vector<16xf32>
    %212 = vector.shape_cast %211 : vector<16xf32> to vector<16x1xf32>
    %cst_72 = arith.constant 3.200000e+01 : f32
    %213 = vector.broadcast %cst_72 : f32 to vector<16x1xf32>
    %214 = arith.divf %212, %213 : vector<16x1xf32>
    %215 = vector.broadcast %214 : vector<16x1xf32> to vector<16x32xf32>
    %216 = arith.subf %210, %215 : vector<16x32xf32>
    %217 = arith.mulf %216, %216 : vector<16x32xf32>
    %cst_73 = arith.constant dense<0.000000e+00> : vector<16xf32>
    %218 = vector.multi_reduction <add>, %217, %cst_73 [1] : vector<16x32xf32> to vector<16xf32>
    %219 = vector.shape_cast %218 : vector<16xf32> to vector<16x1xf32>
    %cst_74 = arith.constant 0.0322580636 : f32
    %220 = vector.broadcast %cst_74 : f32 to vector<16x1xf32>
    %221 = arith.mulf %219, %220 : vector<16x1xf32>
    %222 = math.sqrt %221 : vector<16x1xf32>
    %cst_75 = arith.constant 9.99999997E-7 : f32
    %223 = vector.broadcast %cst_75 : f32 to vector<16x1xf32>
    %224 = arith.addf %222, %223 : vector<16x1xf32>
    %225 = tpu.reciprocal %224 {approx = true} : vector<16x1xf32> -> vector<16x1xf32>
    %226 = vector.broadcast %214 : vector<16x1xf32> to vector<16x32xf32>
    %227 = arith.subf %210, %226 : vector<16x32xf32>
    %228 = vector.broadcast %9 : vector<1x32xf32> to vector<16x32xf32>
    %229 = arith.mulf %228, %227 : vector<16x32xf32>
    %230 = vector.broadcast %225 : vector<16x1xf32> to vector<16x32xf32>
    %231 = arith.mulf %229, %230 : vector<16x32xf32>
    %232 = vector.broadcast %10 : vector<1x32xf32> to vector<16x32xf32>
    %233 = arith.addf %231, %232 : vector<16x32xf32>
    %c0_76 = arith.constant 0 : index
    %c0_77 = arith.constant 0 : index
    %234 = vector.load %arg5[%c0_76, %c0_77] : memref<32x64xf32, #tpu.memory_space<vmem>>, vector<32x64xf32>
    %cst_78 = arith.constant dense<0.000000e+00> : vector<16x64xf32>
    %235 = tpu.matmul %233, %234, %cst_78 {dimension_numbers = #tpu.dot_dimension_numbers<[1], [0], [0], [1], [0, 0, 1, 1], [], []>} : vector<16x32xf32>, vector<32x64xf32>, vector<16x64xf32> -> vector<16x64xf32>
    %236 = vector.broadcast %4 : vector<1x64xf32> to vector<16x64xf32>
    %237 = arith.addf %235, %236 : vector<16x64xf32>
    %cst_79 = arith.constant 0.000000e+00 : f32
    %238 = vector.broadcast %cst_79 : f32 to vector<16x64xf32>
    %239 = arith.maximumf %237, %238 : vector<16x64xf32>
    %c0_80 = arith.constant 0 : index
    %c0_81 = arith.constant 0 : index
    %240 = vector.load %arg6[%c0_80, %c0_81] : memref<64x32xf32, #tpu.memory_space<vmem>>, vector<64x32xf32>
    %cst_82 = arith.constant dense<0.000000e+00> : vector<16x32xf32>
    %241 = tpu.matmul %239, %240, %cst_82 {dimension_numbers = #tpu.dot_dimension_numbers<[1], [0], [0], [1], [0, 0, 1, 1], [], []>} : vector<16x64xf32>, vector<64x32xf32>, vector<16x32xf32> -> vector<16x32xf32>
    %242 = vector.broadcast %6 : vector<1x32xf32> to vector<16x32xf32>
    %243 = arith.addf %241, %242 : vector<16x32xf32>
    %244 = arith.addf %210, %243 : vector<16x32xf32>
    %c0_83 = arith.constant 0 : index
    %c0_84 = arith.constant 0 : index
    %245 = vector.load %arg8[%c0_83, %c0_84] : memref<16x32xf32, #tpu.memory_space<vmem>>, vector<16x32xf32>
    tpu.vector_store %arg8[%c0_83, %c0_84], %244 {strides = array<i32>} : memref<16x32xf32, #tpu.memory_space<vmem>>, vector<16x32xf32>,
    return
  }
  func.func @transform_0(%arg0: i32) -> (i32, i32) {
    %c0_i32 = arith.constant 0 : i32
    %c0_i32_0 = arith.constant 0 : i32
    return %arg0, %c0_i32 : i32, i32
  }
  func.func @transform_1(%arg0: i32) -> (i32, i32, i32) {
    %c0_i32 = arith.constant 0 : i32
    %c0_i32_0 = arith.constant 0 : i32
    %c0_i32_1 = arith.constant 0 : i32
    return %arg0, %c0_i32, %c0_i32_0 : i32, i32, i32
  }
  func.func @transform_2(%arg0: i32) -> (i32, i32) {
    %c0_i32 = arith.constant 0 : i32
    %c0_i32_0 = arith.constant 0 : i32
    %c0_i32_1 = arith.constant 0 : i32
    return %c0_i32, %c0_i32_0 : i32, i32
  }
  func.func @transform_3(%arg0: i32) -> (i32, i32) {
    %c0_i32 = arith.constant 0 : i32
    %c0_i32_0 = arith.constant 0 : i32
    %c0_i32_1 = arith.constant 0 : i32
    return %c0_i32, %c0_i32_0 : i32, i32
  }
  func.func @transform_4(%arg0: i32) -> (i32, i32) {
    %c0_i32 = arith.constant 0 : i32
    %c0_i32_0 = arith.constant 0 : i32
    %c0_i32_1 = arith.constant 0 : i32
    return %c0_i32, %c0_i32_0 : i32, i32
  }
  func.func @transform_5(%arg0: i32) -> (i32, i32) {
    %c0_i32 = arith.constant 0 : i32
    %c0_i32_0 = arith.constant 0 : i32
    %c0_i32_1 = arith.constant 0 : i32
    return %c0_i32, %c0_i32_0 : i32, i32
  }
  func.func @transform_6(%arg0: i32) -> (i32, i32) {
    %c0_i32 = arith.constant 0 : i32
    %c0_i32_0 = arith.constant 0 : i32
    %c0_i32_1 = arith.constant 0 : i32
    return %c0_i32, %c0_i32_0 : i32, i32
  }
  func.func @transform_7(%arg0: i32) -> (i32, i32) {
    %c0_i32 = arith.constant 0 : i32
    %c0_i32_0 = arith.constant 0 : i32
    return %arg0, %c0_i32 : i32, i32
  }
}

</mosaic_0001>

<llo_original>
// kernel: tpu_custom_call.1
$region0: #{tpu_custom_call.1}
  #allocation0 [shape = 'u32[]', space=smem, size = 0x4, offset = 0x4, fixed_abs, tag = 'smem constant byte address 0x4 - core index']
  #allocation1 [shape = 'u32[144,128]{1,0:T(1,128)}', space=vmem, size = 0x12000, scoped, tag = 'internal scratch']
  #allocation2 [shape = 'f32[16,32]{1,0:T(8,128)}', space=vmem, size = 0x2000, scoped, tag = 'scratch operand']
  %s0 = inlined_call_operand.hbm [shape: f32[16,32], index: 0, kind: input, shape index: {}]
  %s1 = inlined_call_operand.vmem [shape: f32[2,1,8], index: 1, kind: input, shape index: {}]
  %s2 = inlined_call_operand.vmem [shape: f32[32,96], index: 2, kind: input, shape index: {}]
  %s3 = inlined_call_operand.vmem [shape: f32[32,32], index: 3, kind: input, shape index: {}]
  %s4 = inlined_call_operand.vmem [shape: f32[32,64], index: 4, kind: input, shape index: {}]
  %s5 = inlined_call_operand.vmem [shape: f32[64,32], index: 5, kind: input, shape index: {}]
  %s6 = inlined_call_operand.vmem [shape: f32[8,96], index: 6, kind: input, shape index: {}]
  %s7 = inlined_call_operand.hbm [shape: f32[16,32], index: 7, kind: output, shape index: {}]
  %s8 = sld [smem:[#allocation0]]
  $region42: #{tpu_custom_call.1} parent=0
    _
  %s10 = ssub.s32 1, %s8
  %s11 = scalar_select 0, %s10, %s8
  $region1: #{tpu_custom_call.1} parent=0
    #allocation3 [shape = 'u8[8192]{0}', space=vmem, size = 0x2000, scoped, tag = 'input window, operand 0, single buffered']
    #allocation4 [shape = 's32[1]{0}', space=sflag, size = 0x4, scoped, tag = 'scoped memory for tpu_custom_call.1']
    #allocation5 [shape = 's32[1]{0}', space=sflag, size = 0x4, scoped, tag = 'scoped memory for tpu_custom_call.1']
    #allocation6 [shape = 'u8[8192]{0}', space=vmem, size = 0x2000, scoped, tag = 'output window, operand 0, single buffered']
    %12 = vsyncpa [#allocation4], 0
    %13 = vsyncpa [#allocation5], 0
    // Predicated region
    $region2: #{tpu_custom_call.1} parent=1 // pred_check
      _
    $region3: #{tpu_custom_call.1} parent=1 // pred_check_branch
      %15 = sbr.rel (0) target = $region5
    $region4: #{tpu_custom_call.1} parent=1 // pred_region
      %s17 = ssub.s32 256, 256
      %18 = vsyncadd [#allocation4], %s17
      %s19 = sshll.u32 [#allocation3], 4
      %s20 = int_to_ptr.vmem [resolvable:$true] %s19
      %25 = dma.hbm_to_vmem [thread:$0]  %s0, 256, %s20, [#allocation4], 128, 128, 8
    $region5: #{tpu_custom_call.1} parent=1 // pred_fallthru
      _
    // Predicated region
    $region6: #{tpu_custom_call.1} parent=1 // pred_check
      _
    $region7: #{tpu_custom_call.1} parent=1 // pred_check_branch
      %27 = sbr.rel (0) target = $region9
    $region8: #{tpu_custom_call.1} parent=1 // pred_region
      _
    $region9: #{tpu_custom_call.1} parent=1 // pred_fallthru
      _
    // Predicated region
    $region10: #{tpu_custom_call.1} parent=1 // pred_check
      _
    $region11: #{tpu_custom_call.1} parent=1 // pred_check_branch
      %29 = sbr.rel (0) target = $region13
    $region12: #{tpu_custom_call.1} parent=1 // pred_region
      _
    $region13: #{tpu_custom_call.1} parent=1 // pred_fallthru
      _
    // Predicated region
    $region14: #{tpu_custom_call.1} parent=1 // pred_check
      _
    $region15: #{tpu_custom_call.1} parent=1 // pred_check_branch
      %31 = sbr.rel (0) target = $region17
    $region16: #{tpu_custom_call.1} parent=1 // pred_region
      _
    $region17: #{tpu_custom_call.1} parent=1 // pred_fallthru
      _
    // Predicated region
    $region18: #{tpu_custom_call.1} parent=1 // pred_check
      _
    $region19: #{tpu_custom_call.1} parent=1 // pred_check_branch
      %33 = sbr.rel (0) target = $region21
    $region20: #{tpu_custom_call.1} parent=1 // pred_region
      _
    $region21: #{tpu_custom_call.1} parent=1 // pred_fallthru
      _
    // Predicated region
    $region22: #{tpu_custom_call.1} parent=1 // pred_check
      _
    $region23: #{tpu_custom_call.1} parent=1 // pred_check_branch
      %35 = sbr.rel (0) target = $region25
    $region24: #{tpu_custom_call.1} parent=1 // pred_region
      _
    $region25: #{tpu_custom_call.1} parent=1 // pred_fallthru
      _
    // Predicated region
    $region26: #{tpu_custom_call.1} parent=1 // pred_check
      _
    $region27: #{tpu_custom_call.1} parent=1 // pred_check_branch
      %37 = sbr.rel (0) target = $region29
    $region28: #{tpu_custom_call.1} parent=1 // pred_region
      _
    $region29: #{tpu_custom_call.1} parent=1 // pred_fallthru
      _
    // Predicated region
    $region30: #{tpu_custom_call.1} parent=1 // pred_check
      _
    $region31: #{tpu_custom_call.1} parent=1 // pred_check_branch
      %39 = sbr.rel (0) target = $region33
    $region32: #{tpu_custom_call.1} parent=1 // pred_region
      %40 = dma.done [#allocation4], 256
    $region33: #{tpu_custom_call.1} parent=1 // pred_fallthru
      _
    %v41 = vld [vmem:[#allocation3] sm:$0xff]
    %v42 = vld [vmem:[#allocation3 + $0x8] sm:$0xff]
    %v43 = vld [vmem:[%s1] sm:$0x1]
    %v44 = vld [vmem:[%s1 + $0x1] sm:$0x1]
    %v45 = vld [vmem:[%s6] sm:$0xff]
    %vm46 = vcmask 261120
    %v47 = vsel %vm46, %v41, 0.0
    %48 = vadd.xlane.f32.xlu0 %v47
    %v49 = vpop.xlane.xlu0 %48
    %v50 = vsel %vm46, %v42, 0.0
    %51 = vadd.xlane.f32.xlu0 %v50
    %v52 = vpop.xlane.xlu0 %51
    %v53 = vrcp.pop 32.0
    %v54 = vmul.f32 %v49, %v53
    %v55 = vmul.f32 %v52, %v53
    %v56 = vsub.f32 %v41, %v54
    %v57 = vsub.f32 %v42, %v55
    %v58 = vmul.f32 %v56, %v56
    %v59 = vmul.f32 %v57, %v57
    %v60 = vsel %vm46, %v58, 0.0
    %61 = vadd.xlane.f32.xlu0 %v60
    %v62 = vpop.xlane.xlu0 %61
    %v63 = vsel %vm46, %v59, 0.0
    %64 = vadd.xlane.f32.xlu0 %v63
    %v65 = vpop.xlane.xlu0 %64
    %v66 = vmul.f32 %v62, 0.032258064
    %v67 = vmul.f32 %v65, 0.032258064
    %v68 = vrsqrt.pop %v66
    %v69 = vmul.f32 %v66, %v68
    %vm70 = vcmp.eq.f32.partialorder %v66, inf
    %v71 = vsel %vm70, %v66, %v69
    %vm72 = vcmp.eq.f32.partialorder %v66, 0.0
    %v73 = vand.u32 %v66, 2147483648
    %v74 = vsel %vm72, %v73, %v71
    %v75 = vrsqrt.pop %v67
    %v76 = vmul.f32 %v67, %v75
    %vm77 = vcmp.eq.f32.partialorder %v67, inf
    %v78 = vsel %vm77, %v67, %v76
    %vm79 = vcmp.eq.f32.partialorder %v67, 0.0
    %v80 = vand.u32 %v67, 2147483648
    %v81 = vsel %vm79, %v80, %v78
    %v82 = vadd.f32 %v74, 1e-06
    %v83 = vadd.f32 %v81, 1e-06
    %v84 = vrcp.pop %v82
    %v85 = vrcp.pop %v83
    %v86 = vlaneseq
    %v87 = vshrl.u32 %v86, 7
    %v88 = vsub.s32 4, %v87
    %v89 = vrot.slane %v45, %v88
    %v90 = vmul.f32 %v89, %v56
    %v91 = vmul.f32 %v89, %v57
    %v92 = vmul.f32 %v90, %v84
    %v93 = vmul.f32 %v91, %v85
    %v94 = vlaneseq
    %v95 = vshrl.u32 %v94, 7
    %v96 = vsub.s32 5, %v95
    %v97 = vrot.slane %v45, %v96
    %v98 = vadd.f32 %v92, %v97
    %v99 = vadd.f32 %v93, %v97
    %v100 = vld [vmem:[%s2] sm:$0xff]
    %v101 = vld [vmem:[%s2 + $0x8] sm:$0xff]
    %v102 = vld [vmem:[%s2 + $0x10] sm:$0xff]
    %v103 = vld [vmem:[%s2 + $0x18] sm:$0xff]
    %v104 = vlaneseq
    %v105 = vshrl.u32 %v104, 7
    %v106 = vsub.s32 0, %v105
    %v107 = vrot.slane %v45, %v106
    %v109 = vsel %vm46, %v98, 0
    %v112 = vsel %vm46, %v99, 0
    %114 = vmatprep.subr.mxu0 0.0
    %115 = vmatpush1.msra.mxu0 %v100
    %116 = vmatprep.subr.mxu0 0.0
    %117 = vmatpush1.msra.mxu0 %v101
    %118 = vmatprep.subr.mxu0 0.0
    %119 = vmatpush1.msra.mxu0 %v102
    %120 = vmatprep.subr.mxu0 0.0
    %121 = vmatpush1.msra.mxu0 %v103
    %122 = vmatprep.subr.mxu0 0.0
    %123 = vmatpush1.msra.mxu0 0.0
    %124 = vmatprep.subr.mxu0 0.0
    %125 = vmatpush1.msra.mxu0 0.0
    %126 = vmatprep.subr.mxu0 0.0
    %127 = vmatpush1.msra.mxu0 0.0
    %128 = vmatprep.subr.mxu0 0.0
    %129 = vmatpush1.msra.mxu0 0.0
    %130 = vmatprep.subr.mxu0 0.0
    %131 = vmatpush1.msra.mxu0 0.0
    %132 = vmatprep.subr.mxu0 0.0
    %133 = vmatpush1.msra.mxu0 0.0
    %134 = vmatprep.subr.mxu0 0.0
    %135 = vmatpush1.msra.mxu0 0.0
    %136 = vmatprep.subr.mxu0 0.0
    %137 = vmatpush1.msra.mxu0 0.0
    %138 = vmatprep.subr.mxu0 0.0
    %139 = vmatpush1.msra.mxu0 0.0
    %140 = vmatprep.subr.mxu0 0.0
    %141 = vmatpush1.msra.mxu0 0.0
    %142 = vmatprep.subr.mxu0 0.0
    %143 = vmatpush1.msra.mxu0 0.0
    %144 = vmatprep.subr.mxu0 0.0
    %145 = vmatpush1.msra.mxu0 0.0
    %146 = vmatprep.subr.mxu0 0.0
    %147 = vmatpush1.msra.mxu0 0.0
    %148 = vmatprep.subr.mxu0 0.0
    %149 = vmatpush1.msra.mxu0 0.0
    %150 = vmatprep.subr.mxu0 0.0
    %151 = vmatpush1.msra.mxu0 0.0
    %152 = vmatprep.subr.mxu0 0.0
    %153 = vmatpush1.msra.mxu0 0.0
    %154 = vmatprep.subr.mxu0 0.0
    %155 = vmatpush1.msra.mxu0 0.0
    %156 = vmatprep.subr.mxu0 0.0
    %157 = vmatpush1.msra.mxu0 0.0
    %158 = vmatprep.subr.mxu0 0.0
    %159 = vmatpush1.msra.mxu0 0.0
    %160 = vmatprep.subr.mxu0 0.0
    %161 = vmatpush1.msra.mxu0 0.0
    %162 = vmatprep.subr.mxu0 0.0
    %163 = vmatpush1.msra.mxu0 0.0
    %164 = vmatprep.subr.mxu0 0.0
    %165 = vmatpush1.msra.mxu0 0.0
    %166 = vmatprep.subr.mxu0 0.0
    %167 = vmatpush1.msra.mxu0 0.0
    %168 = vmatprep.subr.mxu0 0.0
    %169 = vmatpush1.msra.mxu0 0.0
    %170 = vmatprep.subr.mxu0 0.0
    %171 = vmatpush1.msra.mxu0 0.0
    %172 = vmatprep.subr.mxu0 0.0
    %173 = vmatpush1.msra.mxu0 0.0
    %174 = vmatprep.subr.mxu0 0.0
    %175 = vmatpush1.msra.mxu0 0.0
    %176 = vmatprep.subr.mxu0 0.0
    %177 = vmatpush1.msra.mxu0 0.0
    %178 = vmatprep.mubr.f32.mxu0 0.0
    %179 = vmatmul.mubr.f32.gmra.mrb[0].mxu0 %v109
    %v180 = vpop.f32.mrb[0].mxu0
    %v181 = vadd.f32 %v107, %v180
    %v182 = vpop.f32.mrb[0].mxu0
    %183 = vmatprep.mubr.f32.mxu0 0.0
    %184 = vmatmul.mubr.f32.gmra.mrb[0].mxu0 %v112
    %v185 = vpop.f32.mrb[0].mxu0
    %v186 = vadd.f32 %v107, %v185
    %v187 = vpop.f32.mrb[0].mxu0
    %188 = vdwg.mxu0
    %190 = vrot.lane.b32.xlu0 %v181, 96
    %v191 = vpop.permute.xlu0 %190
    %vm192 = vcmask 64512
    %v193 = vsel %vm192, %v181, 0
    %v195 = vsel %vm192, %v191, 0
    %197 = vmatprep.subr.mxu0 0.0
    %198 = vmatpush1.xpose.msra.mxu0 %v195
    %199 = vmatprep.subr.mxu0 0.0
    %200 = vmatpush1.xpose.msra.mxu0 0.0
    %201 = vmatprep.subr.mxu0 0.0
    %202 = vmatpush1.xpose.msra.mxu0 0.0
    %203 = vmatprep.subr.mxu0 0.0
    %204 = vmatpush1.xpose.msra.mxu0 0.0
    %205 = vmatprep.subr.mxu0 0.0
    %206 = vmatpush1.xpose.msra.mxu0 0.0
    %207 = vmatprep.subr.mxu0 0.0
    %208 = vmatpush1.xpose.msra.mxu0 0.0
    %209 = vmatprep.subr.mxu0 0.0
    %210 = vmatpush1.xpose.msra.mxu0 0.0
    %211 = vmatprep.subr.mxu0 0.0
    %212 = vmatpush1.xpose.msra.mxu0 0.0
    %213 = vmatprep.subr.mxu0 0.0
    %214 = vmatpush1.xpose.msra.mxu0 0.0
    %215 = vmatprep.subr.mxu0 0.0
    %216 = vmatpush1.xpose.msra.mxu0 0.0
    %217 = vmatprep.subr.mxu0 0.0
    %218 = vmatpush1.xpose.msra.mxu0 0.0
    %219 = vmatprep.subr.mxu0 0.0
    %220 = vmatpush1.xpose.msra.mxu0 0.0
    %221 = vmatprep.subr.mxu0 0.0
    %222 = vmatpush1.xpose.msra.mxu0 0.0
    %223 = vmatprep.subr.mxu0 0.0
    %224 = vmatpush1.xpose.msra.mxu0 0.0
    %225 = vmatprep.subr.mxu0 0.0
    %226 = vmatpush1.xpose.msra.mxu0 0.0
    %227 = vmatprep.subr.mxu0 0.0
    %228 = vmatpush1.xpose.msra.mxu0 0.0
    %229 = vmatprep.subr.mxu0 0.0
    %230 = vmatpush1.xpose.msra.mxu0 0.0
    %231 = vmatprep.subr.mxu0 0.0
    %232 = vmatpush1.xpose.msra.mxu0 0.0
    %233 = vmatprep.subr.mxu0 0.0
    %234 = vmatpush1.xpose.msra.mxu0 0.0
    %235 = vmatprep.subr.mxu0 0.0
    %236 = vmatpush1.xpose.msra.mxu0 0.0
    %237 = vmatprep.subr.mxu0 0.0
    %238 = vmatpush1.xpose.msra.mxu0 0.0
    %239 = vmatprep.subr.mxu0 0.0
    %240 = vmatpush1.xpose.msra.mxu0 0.0
    %241 = vmatprep.subr.mxu0 0.0
    %242 = vmatpush1.xpose.msra.mxu0 0.0
    %243 = vmatprep.subr.mxu0 0.0
    %244 = vmatpush1.xpose.msra.mxu0 0.0
    %245 = vmatprep.subr.mxu0 0.0
    %246 = vmatpush1.xpose.msra.mxu0 0.0
    %247 = vmatprep.subr.mxu0 0.0
    %248 = vmatpush1.xpose.msra.mxu0 0.0
    %249 = vmatprep.subr.mxu0 0.0
    %250 = vmatpush1.xpose.msra.mxu0 0.0
    %251 = vmatprep.subr.mxu0 0.0
    %252 = vmatpush1.xpose.msra.mxu0 0.0
    %253 = vmatprep.subr.mxu0 0.0
    %254 = vmatpush1.xpose.msra.mxu0 0.0
    %255 = vmatprep.subr.mxu0 0.0
    %256 = vmatpush1.xpose.msra.mxu0 0.0
    %257 = vmatprep.subr.mxu0 0.0
    %258 = vmatpush1.xpose.msra.mxu0 0.0
    %259 = vmatprep.subr.mxu0 0.0
    %260 = vmatpush1.xpose.msra.mxu0 0.0
    %261 = vmatprep.mubr.f32.mxu0 0.0
    %262 = vmatmul.mubr.f32.gmra.mrb[0].mxu0 %v193
    %v263 = vpop.f32.mrb[0].mxu0
    %v264 = vadd.f32 0.0, %v263
    %v265 = vpop.f32.mrb[0].mxu0
    %266 = vdwg.mxu0
    %v267 = vmul.f32 %v264, 0.35355338
    %v269 = vlaneseq
    %v270 = vshrl.u32 %v269, 7
    %v271 = vsub.s32 0, %v270
    %v272 = vrot.slane %v43, %v271
    %v274 = vadd.f32 %v267, %v272
    %v275 = vsel %vm192, %v274, -inf
    %276 = vmax.xlane.f32.xlu0 %v275
    %v277 = vpop.xlane.xlu0 %276
    %v278 = vsub.f32 %v274, %v277
    %v279 = vmul.f32 %v278, 1.442695
    %v280 = vpow.pop %v279
    %v281 = vsel %vm192, %v280, 0.0
    %282 = vadd.xlane.f32.xlu0 %v281
    %v283 = vpop.xlane.xlu0 %282
    %v284 = vrcp.pop %v283
    %v285 = vmul.f32 %v280, %v284
    %286 = vrot.lane.b32.xlu0 %v181, 64
    %v287 = vpop.permute.xlu0 %286
    %v290 = vsel %vm192, %v285, 0
    %292 = vmatprep.subr.mxu0 0.0
    %293 = vmatpush1.msra.mxu0 %v287
    %294 = vmatprep.subr.mxu0 0.0
    %295 = vmatpush1.msra.mxu0 0.0
    %296 = vmatprep.subr.mxu0 0.0
    %297 = vmatpush1.msra.mxu0 0.0
    %298 = vmatprep.subr.mxu0 0.0
    %299 = vmatpush1.msra.mxu0 0.0
    %300 = vmatprep.subr.mxu0 0.0
    %301 = vmatpush1.msra.mxu0 0.0
    %302 = vmatprep.subr.mxu0 0.0
    %303 = vmatpush1.msra.mxu0 0.0
    %304 = vmatprep.subr.mxu0 0.0
    %305 = vmatpush1.msra.mxu0 0.0
    %306 = vmatprep.subr.mxu0 0.0
    %307 = vmatpush1.msra.mxu0 0.0
    %308 = vmatprep.subr.mxu0 0.0
    %309 = vmatpush1.msra.mxu0 0.0
    %310 = vmatprep.subr.mxu0 0.0
    %311 = vmatpush1.msra.mxu0 0.0
    %312 = vmatprep.subr.mxu0 0.0
    %313 = vmatpush1.msra.mxu0 0.0
    %314 = vmatprep.subr.mxu0 0.0
    %315 = vmatpush1.msra.mxu0 0.0
    %316 = vmatprep.subr.mxu0 0.0
    %317 = vmatpush1.msra.mxu0 0.0
    %318 = vmatprep.subr.mxu0 0.0
    %319 = vmatpush1.msra.mxu0 0.0
    %320 = vmatprep.subr.mxu0 0.0
    %321 = vmatpush1.msra.mxu0 0.0
    %322 = vmatprep.subr.mxu0 0.0
    %323 = vmatpush1.msra.mxu0 0.0
    %324 = vmatprep.subr.mxu0 0.0
    %325 = vmatpush1.msra.mxu0 0.0
    %326 = vmatprep.subr.mxu0 0.0
    %327 = vmatpush1.msra.mxu0 0.0
    %328 = vmatprep.subr.mxu0 0.0
    %329 = vmatpush1.msra.mxu0 0.0
    %330 = vmatprep.subr.mxu0 0.0
    %331 = vmatpush1.msra.mxu0 0.0
    %332 = vmatprep.subr.mxu0 0.0
    %333 = vmatpush1.msra.mxu0 0.0
    %334 = vmatprep.subr.mxu0 0.0
    %335 = vmatpush1.msra.mxu0 0.0
    %336 = vmatprep.subr.mxu0 0.0
    %337 = vmatpush1.msra.mxu0 0.0
    %338 = vmatprep.subr.mxu0 0.0
    %339 = vmatpush1.msra.mxu0 0.0
    %340 = vmatprep.subr.mxu0 0.0
    %341 = vmatpush1.msra.mxu0 0.0
    %342 = vmatprep.subr.mxu0 0.0
    %343 = vmatpush1.msra.mxu0 0.0
    %344 = vmatprep.subr.mxu0 0.0
    %345 = vmatpush1.msra.mxu0 0.0
    %346 = vmatprep.subr.mxu0 0.0
    %347 = vmatpush1.msra.mxu0 0.0
    %348 = vmatprep.subr.mxu0 0.0
    %349 = vmatpush1.msra.mxu0 0.0
    %350 = vmatprep.subr.mxu0 0.0
    %351 = vmatpush1.msra.mxu0 0.0
    %352 = vmatprep.subr.mxu0 0.0
    %353 = vmatpush1.msra.mxu0 0.0
    %354 = vmatprep.subr.mxu0 0.0
    %355 = vmatpush1.msra.mxu0 0.0
    %356 = vmatprep.mubr.f32.mxu0 0.0
    %357 = vmatmul.mubr.f32.gmra.mrb[0].mxu0 %v290
    %v358 = vpop.f32.mrb[0].mxu0
    %v359 = vadd.f32 0.0, %v358
    %v360 = vpop.f32.mrb[0].mxu0
    %361 = vdwg.mxu0
    %362 = vst.msk [vmem:[#allocation2] sm:$0xff] %vm192, %v359
    %363 = vrot.lane.b32.xlu0 %v181, 120
    %v364 = vpop.permute.xlu0 %363
    %365 = vrot.lane.b32.xlu0 %v181, 88
    %v366 = vpop.permute.xlu0 %365
    %v367 = vsel %vm192, %v364, 0
    %v369 = vsel %vm192, %v366, 0
    %371 = vmatprep.subr.mxu0 0.0
    %372 = vmatpush1.xpose.msra.mxu0 %v369
    %373 = vmatprep.subr.mxu0 0.0
    %374 = vmatpush1.xpose.msra.mxu0 0.0
    %375 = vmatprep.subr.mxu0 0.0
    %376 = vmatpush1.xpose.msra.mxu0 0.0
    %377 = vmatprep.subr.mxu0 0.0
    %378 = vmatpush1.xpose.msra.mxu0 0.0
    %379 = vmatprep.subr.mxu0 0.0
    %380 = vmatpush1.xpose.msra.mxu0 0.0
    %381 = vmatprep.subr.mxu0 0.0
    %382 = vmatpush1.xpose.msra.mxu0 0.0
    %383 = vmatprep.subr.mxu0 0.0
    %384 = vmatpush1.xpose.msra.mxu0 0.0
    %385 = vmatprep.subr.mxu0 0.0
    %386 = vmatpush1.xpose.msra.mxu0 0.0
    %387 = vmatprep.subr.mxu0 0.0
    %388 = vmatpush1.xpose.msra.mxu0 0.0
    %389 = vmatprep.subr.mxu0 0.0
    %390 = vmatpush1.xpose.msra.mxu0 0.0
    %391 = vmatprep.subr.mxu0 0.0
    %392 = vmatpush1.xpose.msra.mxu0 0.0
    %393 = vmatprep.subr.mxu0 0.0
    %394 = vmatpush1.xpose.msra.mxu0 0.0
    %395 = vmatprep.subr.mxu0 0.0
    %396 = vmatpush1.xpose.msra.mxu0 0.0
    %397 = vmatprep.subr.mxu0 0.0
    %398 = vmatpush1.xpose.msra.mxu0 0.0
    %399 = vmatprep.subr.mxu0 0.0
    %400 = vmatpush1.xpose.msra.mxu0 0.0
    %401 = vmatprep.subr.mxu0 0.0
    %402 = vmatpush1.xpose.msra.mxu0 0.0
    %403 = vmatprep.subr.mxu0 0.0
    %404 = vmatpush1.xpose.msra.mxu0 0.0
    %405 = vmatprep.subr.mxu0 0.0
    %406 = vmatpush1.xpose.msra.mxu0 0.0
    %407 = vmatprep.subr.mxu0 0.0
    %408 = vmatpush1.xpose.msra.mxu0 0.0
    %409 = vmatprep.subr.mxu0 0.0
    %410 = vmatpush1.xpose.msra.mxu0 0.0
    %411 = vmatprep.subr.mxu0 0.0
    %412 = vmatpush1.xpose.msra.mxu0 0.0
    %413 = vmatprep.subr.mxu0 0.0
    %414 = vmatpush1.xpose.msra.mxu0 0.0
    %415 = vmatprep.subr.mxu0 0.0
    %416 = vmatpush1.xpose.msra.mxu0 0.0
    %417 = vmatprep.subr.mxu0 0.0
    %418 = vmatpush1.xpose.msra.mxu0 0.0
    %419 = vmatprep.subr.mxu0 0.0
    %420 = vmatpush1.xpose.msra.mxu0 0.0
    %421 = vmatprep.subr.mxu0 0.0
    %422 = vmatpush1.xpose.msra.mxu0 0.0
    %423 = vmatprep.subr.mxu0 0.0
    %424 = vmatpush1.xpose.msra.mxu0 0.0
    %425 = vmatprep.subr.mxu0 0.0
    %426 = vmatpush1.xpose.msra.mxu0 0.0
    %427 = vmatprep.subr.mxu0 0.0
    %428 = vmatpush1.xpose.msra.mxu0 0.0
    %429 = vmatprep.subr.mxu0 0.0
    %430 = vmatpush1.xpose.msra.mxu0 0.0
    %431 = vmatprep.subr.mxu0 0.0
    %432 = vmatpush1.xpose.msra.mxu0 0.0
    %433 = vmatprep.subr.mxu0 0.0
    %434 = vmatpush1.xpose.msra.mxu0 0.0
    %435 = vmatprep.mubr.f32.mxu0 0.0
    %436 = vmatmul.mubr.f32.gmra.mrb[0].mxu0 %v367
    %v437 = vpop.f32.mrb[0].mxu0
    %v438 = vadd.f32 0.0, %v437
    %v439 = vpop.f32.mrb[0].mxu0
    %440 = vdwg.mxu0
    %v441 = vmul.f32 %v438, 0.35355338
    %v442 = vadd.f32 %v441, %v272
    %v443 = vsel %vm192, %v442, -inf
    %444 = vmax.xlane.f32.xlu0 %v443
    %v445 = vpop.xlane.xlu0 %444
    %v446 = vsub.f32 %v442, %v445
    %v447 = vmul.f32 %v446, 1.442695
    %v448 = vpow.pop %v447
    %v449 = vsel %vm192, %v448, 0.0
    %450 = vadd.xlane.f32.xlu0 %v449
    %v451 = vpop.xlane.xlu0 %450
    %v452 = vrcp.pop %v451
    %v453 = vmul.f32 %v448, %v452
    %454 = vrot.lane.b32.xlu0 %v181, 56
    %v455 = vpop.permute.xlu0 %454
    %v458 = vsel %vm192, %v453, 0
    %460 = vmatprep.subr.mxu0 0.0
    %461 = vmatpush1.msra.mxu0 %v455
    %462 = vmatprep.subr.mxu0 0.0
    %463 = vmatpush1.msra.mxu0 0.0
    %464 = vmatprep.subr.mxu0 0.0
    %465 = vmatpush1.msra.mxu0 0.0
    %466 = vmatprep.subr.mxu0 0.0
    %467 = vmatpush1.msra.mxu0 0.0
    %468 = vmatprep.subr.mxu0 0.0
    %469 = vmatpush1.msra.mxu0 0.0
    %470 = vmatprep.subr.mxu0 0.0
    %471 = vmatpush1.msra.mxu0 0.0
    %472 = vmatprep.subr.mxu0 0.0
    %473 = vmatpush1.msra.mxu0 0.0
    %474 = vmatprep.subr.mxu0 0.0
    %475 = vmatpush1.msra.mxu0 0.0
    %476 = vmatprep.subr.mxu0 0.0
    %477 = vmatpush1.msra.mxu0 0.0
    %478 = vmatprep.subr.mxu0 0.0
    %479 = vmatpush1.msra.mxu0 0.0
    %480 = vmatprep.subr.mxu0 0.0
    %481 = vmatpush1.msra.mxu0 0.0
    %482 = vmatprep.subr.mxu0 0.0
    %483 = vmatpush1.msra.mxu0 0.0
    %484 = vmatprep.subr.mxu0 0.0
    %485 = vmatpush1.msra.mxu0 0.0
    %486 = vmatprep.subr.mxu0 0.0
    %487 = vmatpush1.msra.mxu0 0.0
    %488 = vmatprep.subr.mxu0 0.0
    %489 = vmatpush1.msra.mxu0 0.0
    %490 = vmatprep.subr.mxu0 0.0
    %491 = vmatpush1.msra.mxu0 0.0
    %492 = vmatprep.subr.mxu0 0.0
    %493 = vmatpush1.msra.mxu0 0.0
    %494 = vmatprep.subr.mxu0 0.0
    %495 = vmatpush1.msra.mxu0 0.0
    %496 = vmatprep.subr.mxu0 0.0
    %497 = vmatpush1.msra.mxu0 0.0
    %498 = vmatprep.subr.mxu0 0.0
    %499 = vmatpush1.msra.mxu0 0.0
    %500 = vmatprep.subr.mxu0 0.0
    %501 = vmatpush1.msra.mxu0 0.0
    %502 = vmatprep.subr.mxu0 0.0
    %503 = vmatpush1.msra.mxu0 0.0
    %504 = vmatprep.subr.mxu0 0.0
    %505 = vmatpush1.msra.mxu0 0.0
    %506 = vmatprep.subr.mxu0 0.0
    %507 = vmatpush1.msra.mxu0 0.0
    %508 = vmatprep.subr.mxu0 0.0
    %509 = vmatpush1.msra.mxu0 0.0
    %510 = vmatprep.subr.mxu0 0.0
    %511 = vmatpush1.msra.mxu0 0.0
    %512 = vmatprep.subr.mxu0 0.0
    %513 = vmatpush1.msra.mxu0 0.0
    %514 = vmatprep.subr.mxu0 0.0
    %515 = vmatpush1.msra.mxu0 0.0
    %516 = vmatprep.subr.mxu0 0.0
    %517 = vmatpush1.msra.mxu0 0.0
    %518 = vmatprep.subr.mxu0 0.0
    %519 = vmatpush1.msra.mxu0 0.0
    %520 = vmatprep.subr.mxu0 0.0
    %521 = vmatpush1.msra.mxu0 0.0
    %522 = vmatprep.subr.mxu0 0.0
    %523 = vmatpush1.msra.mxu0 0.0
    %524 = vmatprep.mubr.f32.mxu0 0.0
    %525 = vmatmul.mubr.f32.gmra.mrb[0].mxu0 %v458
    %v526 = vpop.f32.mrb[0].mxu0
    %v527 = vadd.f32 0.0, %v526
    %v528 = vpop.f32.mrb[0].mxu0
    %529 = vdwg.mxu0
    %531 = vrot.lane.b32.xlu0 %v527, 8
    %v532 = vpop.permute.xlu0 %531
    %vm534 = vcmask 130112
    %535 = vst.msk [vmem:[#allocation2] sm:$0xff] %vm534, %v532
    %536 = vrot.lane.b32.xlu0 %v181, 112
    %v537 = vpop.permute.xlu0 %536
    %538 = vrot.lane.b32.xlu0 %v181, 80
    %v539 = vpop.permute.xlu0 %538
    %v540 = vsel %vm192, %v537, 0
    %v542 = vsel %vm192, %v539, 0
    %544 = vmatprep.subr.mxu0 0.0
    %545 = vmatpush1.xpose.msra.mxu0 %v542
    %546 = vmatprep.subr.mxu0 0.0
    %547 = vmatpush1.xpose.msra.mxu0 0.0
    %548 = vmatprep.subr.mxu0 0.0
    %549 = vmatpush1.xpose.msra.mxu0 0.0
    %550 = vmatprep.subr.mxu0 0.0
    %551 = vmatpush1.xpose.msra.mxu0 0.0
    %552 = vmatprep.subr.mxu0 0.0
    %553 = vmatpush1.xpose.msra.mxu0 0.0
    %554 = vmatprep.subr.mxu0 0.0
    %555 = vmatpush1.xpose.msra.mxu0 0.0
    %556 = vmatprep.subr.mxu0 0.0
    %557 = vmatpush1.xpose.msra.mxu0 0.0
    %558 = vmatprep.subr.mxu0 0.0
    %559 = vmatpush1.xpose.msra.mxu0 0.0
    %560 = vmatprep.subr.mxu0 0.0
    %561 = vmatpush1.xpose.msra.mxu0 0.0
    %562 = vmatprep.subr.mxu0 0.0
    %563 = vmatpush1.xpose.msra.mxu0 0.0
    %564 = vmatprep.subr.mxu0 0.0
    %565 = vmatpush1.xpose.msra.mxu0 0.0
    %566 = vmatprep.subr.mxu0 0.0
    %567 = vmatpush1.xpose.msra.mxu0 0.0
    %568 = vmatprep.subr.mxu0 0.0
    %569 = vmatpush1.xpose.msra.mxu0 0.0
    %570 = vmatprep.subr.mxu0 0.0
    %571 = vmatpush1.xpose.msra.mxu0 0.0
    %572 = vmatprep.subr.mxu0 0.0
    %573 = vmatpush1.xpose.msra.mxu0 0.0
    %574 = vmatprep.subr.mxu0 0.0
    %575 = vmatpush1.xpose.msra.mxu0 0.0
    %576 = vmatprep.subr.mxu0 0.0
    %577 = vmatpush1.xpose.msra.mxu0 0.0
    %578 = vmatprep.subr.mxu0 0.0
    %579 = vmatpush1.xpose.msra.mxu0 0.0
    %580 = vmatprep.subr.mxu0 0.0
    %581 = vmatpush1.xpose.msra.mxu0 0.0
    %582 = vmatprep.subr.mxu0 0.0
    %583 = vmatpush1.xpose.msra.mxu0 0.0
    %584 = vmatprep.subr.mxu0 0.0
    %585 = vmatpush1.xpose.msra.mxu0 0.0
    %586 = vmatprep.subr.mxu0 0.0
    %587 = vmatpush1.xpose.msra.mxu0 0.0
    %588 = vmatprep.subr.mxu0 0.0
    %589 = vmatpush1.xpose.msra.mxu0 0.0
    %590 = vmatprep.subr.mxu0 0.0
    %591 = vmatpush1.xpose.msra.mxu0 0.0
    %592 = vmatprep.subr.mxu0 0.0
    %593 = vmatpush1.xpose.msra.mxu0 0.0
    %594 = vmatprep.subr.mxu0 0.0
    %595 = vmatpush1.xpose.msra.mxu0 0.0
    %596 = vmatprep.subr.mxu0 0.0
    %597 = vmatpush1.xpose.msra.mxu0 0.0
    %598 = vmatprep.subr.mxu0 0.0
    %599 = vmatpush1.xpose.msra.mxu0 0.0
    %600 = vmatprep.subr.mxu0 0.0
    %601 = vmatpush1.xpose.msra.mxu0 0.0
    %602 = vmatprep.subr.mxu0 0.0
    %603 = vmatpush1.xpose.msra.mxu0 0.0
    %604 = vmatprep.subr.mxu0 0.0
    %605 = vmatpush1.xpose.msra.mxu0 0.0
    %606 = vmatprep.subr.mxu0 0.0
    %607 = vmatpush1.xpose.msra.mxu0 0.0
    %608 = vmatprep.mubr.f32.mxu0 0.0
    %609 = vmatmul.mubr.f32.gmra.mrb[0].mxu0 %v540
    %v610 = vpop.f32.mrb[0].mxu0
    %v611 = vadd.f32 0.0, %v610
    %v612 = vpop.f32.mrb[0].mxu0
    %613 = vdwg.mxu0
    %v614 = vmul.f32 %v611, 0.35355338
    %v615 = vadd.f32 %v614, %v272
    %v616 = vsel %vm192, %v615, -inf
    %617 = vmax.xlane.f32.xlu0 %v616
    %v618 = vpop.xlane.xlu0 %617
    %v619 = vsub.f32 %v615, %v618
    %v620 = vmul.f32 %v619, 1.442695
    %v621 = vpow.pop %v620
    %v622 = vsel %vm192, %v621, 0.0
    %623 = vadd.xlane.f32.xlu0 %v622
    %v624 = vpop.xlane.xlu0 %623
    %v625 = vrcp.pop %v624
    %v626 = vmul.f32 %v621, %v625
    %627 = vrot.lane.b32.xlu0 %v181, 48
    %v628 = vpop.permute.xlu0 %627
    %v631 = vsel %vm192, %v626, 0
    %633 = vmatprep.subr.mxu0 0.0
    %634 = vmatpush1.msra.mxu0 %v628
    %635 = vmatprep.subr.mxu0 0.0
    %636 = vmatpush1.msra.mxu0 0.0
    %637 = vmatprep.subr.mxu0 0.0
    %638 = vmatpush1.msra.mxu0 0.0
    %639 = vmatprep.subr.mxu0 0.0
    %640 = vmatpush1.msra.mxu0 0.0
    %641 = vmatprep.subr.mxu0 0.0
    %642 = vmatpush1.msra.mxu0 0.0
    %643 = vmatprep.subr.mxu0 0.0
    %644 = vmatpush1.msra.mxu0 0.0
    %645 = vmatprep.subr.mxu0 0.0
    %646 = vmatpush1.msra.mxu0 0.0
    %647 = vmatprep.subr.mxu0 0.0
    %648 = vmatpush1.msra.mxu0 0.0
    %649 = vmatprep.subr.mxu0 0.0
    %650 = vmatpush1.msra.mxu0 0.0
    %651 = vmatprep.subr.mxu0 0.0
    %652 = vmatpush1.msra.mxu0 0.0
    %653 = vmatprep.subr.mxu0 0.0
    %654 = vmatpush1.msra.mxu0 0.0
    %655 = vmatprep.subr.mxu0 0.0
    %656 = vmatpush1.msra.mxu0 0.0
    %657 = vmatprep.subr.mxu0 0.0
    %658 = vmatpush1.msra.mxu0 0.0
    %659 = vmatprep.subr.mxu0 0.0
    %660 = vmatpush1.msra.mxu0 0.0
    %661 = vmatprep.subr.mxu0 0.0
    %662 = vmatpush1.msra.mxu0 0.0
    %663 = vmatprep.subr.mxu0 0.0
    %664 = vmatpush1.msra.mxu0 0.0
    %665 = vmatprep.subr.mxu0 0.0
    %666 = vmatpush1.msra.mxu0 0.0
    %667 = vmatprep.subr.mxu0 0.0
    %668 = vmatpush1.msra.mxu0 0.0
    %669 = vmatprep.subr.mxu0 0.0
    %670 = vmatpush1.msra.mxu0 0.0
    %671 = vmatprep.subr.mxu0 0.0
    %672 = vmatpush1.msra.mxu0 0.0
    %673 = vmatprep.subr.mxu0 0.0
    %674 = vmatpush1.msra.mxu0 0.0
    %675 = vmatprep.subr.mxu0 0.0
    %676 = vmatpush1.msra.mxu0 0.0
    %677 = vmatprep.subr.mxu0 0.0
    %678 = vmatpush1.msra.mxu0 0.0
    %679 = vmatprep.subr.mxu0 0.0
    %680 = vmatpush1.msra.mxu0 0.0
    %681 = vmatprep.subr.mxu0 0.0
    %682 = vmatpush1.msra.mxu0 0.0
    %683 = vmatprep.subr.mxu0 0.0
    %684 = vmatpush1.msra.mxu0 0.0
    %685 = vmatprep.subr.mxu0 0.0
    %686 = vmatpush1.msra.mxu0 0.0
    %687 = vmatprep.subr.mxu0 0.0
    %688 = vmatpush1.msra.mxu0 0.0
    %689 = vmatprep.subr.mxu0 0.0
    %690 = vmatpush1.msra.mxu0 0.0
    %691 = vmatprep.subr.mxu0 0.0
    %692 = vmatpush1.msra.mxu0 0.0
    %693 = vmatprep.subr.mxu0 0.0
    %694 = vmatpush1.msra.mxu0 0.0
    %695 = vmatprep.subr.mxu0 0.0
    %696 = vmatpush1.msra.mxu0 0.0
    %697 = vmatprep.mubr.f32.mxu0 0.0
    %698 = vmatmul.mubr.f32.gmra.mrb[0].mxu0 %v631
    %v699 = vpop.f32.mrb[0].mxu0
    %v700 = vadd.f32 0.0, %v699
    %v701 = vpop.f32.mrb[0].mxu0
    %702 = vdwg.mxu0
    %704 = vrot.lane.b32.xlu0 %v700, 16
    %v705 = vpop.permute.xlu0 %704
    %vm707 = vcmask 195712
    %708 = vst.msk [vmem:[#allocation2] sm:$0xff] %vm707, %v705
    %709 = vrot.lane.b32.xlu0 %v181, 104
    %v710 = vpop.permute.xlu0 %709
    %711 = vrot.lane.b32.xlu0 %v181, 72
    %v712 = vpop.permute.xlu0 %711
    %v713 = vsel %vm192, %v710, 0
    %v715 = vsel %vm192, %v712, 0
    %717 = vmatprep.subr.mxu0 0.0
    %718 = vmatpush1.xpose.msra.mxu0 %v715
    %719 = vmatprep.subr.mxu0 0.0
    %720 = vmatpush1.xpose.msra.mxu0 0.0
    %721 = vmatprep.subr.mxu0 0.0
    %722 = vmatpush1.xpose.msra.mxu0 0.0
    %723 = vmatprep.subr.mxu0 0.0
    %724 = vmatpush1.xpose.msra.mxu0 0.0
    %725 = vmatprep.subr.mxu0 0.0
    %726 = vmatpush1.xpose.msra.mxu0 0.0
    %727 = vmatprep.subr.mxu0 0.0
    %728 = vmatpush1.xpose.msra.mxu0 0.0
    %729 = vmatprep.subr.mxu0 0.0
    %730 = vmatpush1.xpose.msra.mxu0 0.0
    %731 = vmatprep.subr.mxu0 0.0
    %732 = vmatpush1.xpose.msra.mxu0 0.0
    %733 = vmatprep.subr.mxu0 0.0
    %734 = vmatpush1.xpose.msra.mxu0 0.0
    %735 = vmatprep.subr.mxu0 0.0
    %736 = vmatpush1.xpose.msra.mxu0 0.0
    %737 = vmatprep.subr.mxu0 0.0
    %738 = vmatpush1.xpose.msra.mxu0 0.0
    %739 = vmatprep.subr.mxu0 0.0
    %740 = vmatpush1.xpose.msra.mxu0 0.0
    %741 = vmatprep.subr.mxu0 0.0
    %742 = vmatpush1.xpose.msra.mxu0 0.0
    %743 = vmatprep.subr.mxu0 0.0
    %744 = vmatpush1.xpose.msra.mxu0 0.0
    %745 = vmatprep.subr.mxu0 0.0
    %746 = vmatpush1.xpose.msra.mxu0 0.0
    %747 = vmatprep.subr.mxu0 0.0
    %748 = vmatpush1.xpose.msra.mxu0 0.0
    %749 = vmatprep.subr.mxu0 0.0
    %750 = vmatpush1.xpose.msra.mxu0 0.0
    %751 = vmatprep.subr.mxu0 0.0
    %752 = vmatpush1.xpose.msra.mxu0 0.0
    %753 = vmatprep.subr.mxu0 0.0
    %754 = vmatpush1.xpose.msra.mxu0 0.0
    %755 = vmatprep.subr.mxu0 0.0
    %756 = vmatpush1.xpose.msra.mxu0 0.0
    %757 = vmatprep.subr.mxu0 0.0
    %758 = vmatpush1.xpose.msra.mxu0 0.0
    %759 = vmatprep.subr.mxu0 0.0
    %760 = vmatpush1.xpose.msra.mxu0 0.0
    %761 = vmatprep.subr.mxu0 0.0
    %762 = vmatpush1.xpose.msra.mxu0 0.0
    %763 = vmatprep.subr.mxu0 0.0
    %764 = vmatpush1.xpose.msra.mxu0 0.0
    %765 = vmatprep.subr.mxu0 0.0
    %766 = vmatpush1.xpose.msra.mxu0 0.0
    %767 = vmatprep.subr.mxu0 0.0
    %768 = vmatpush1.xpose.msra.mxu0 0.0
    %769 = vmatprep.subr.mxu0 0.0
    %770 = vmatpush1.xpose.msra.mxu0 0.0
    %771 = vmatprep.subr.mxu0 0.0
    %772 = vmatpush1.xpose.msra.mxu0 0.0
    %773 = vmatprep.subr.mxu0 0.0
    %774 = vmatpush1.xpose.msra.mxu0 0.0
    %775 = vmatprep.subr.mxu0 0.0
    %776 = vmatpush1.xpose.msra.mxu0 0.0
    %777 = vmatprep.subr.mxu0 0.0
    %778 = vmatpush1.xpose.msra.mxu0 0.0
    %779 = vmatprep.subr.mxu0 0.0
    %780 = vmatpush1.xpose.msra.mxu0 0.0
    %781 = vmatprep.mubr.f32.mxu0 0.0
    %782 = vmatmul.mubr.f32.gmra.mrb[0].mxu0 %v713
    %v783 = vpop.f32.mrb[0].mxu0
    %v784 = vadd.f32 0.0, %v783
    %v785 = vpop.f32.mrb[0].mxu0
    %786 = vdwg.mxu0
    %v787 = vmul.f32 %v784, 0.35355338
    %v788 = vadd.f32 %v787, %v272
    %v789 = vsel %vm192, %v788, -inf
    %790 = vmax.xlane.f32.xlu0 %v789
    %v791 = vpop.xlane.xlu0 %790
    %v792 = vsub.f32 %v788, %v791
    %v793 = vmul.f32 %v792, 1.442695
    %v794 = vpow.pop %v793
    %v795 = vsel %vm192, %v794, 0.0
    %796 = vadd.xlane.f32.xlu0 %v795
    %v797 = vpop.xlane.xlu0 %796
    %v798 = vrcp.pop %v797
    %v799 = vmul.f32 %v794, %v798
    %800 = vrot.lane.b32.xlu0 %v181, 40
    %v801 = vpop.permute.xlu0 %800
    %v804 = vsel %vm192, %v799, 0
    %806 = vmatprep.subr.mxu0 0.0
    %807 = vmatpush1.msra.mxu0 %v801
    %808 = vmatprep.subr.mxu0 0.0
    %809 = vmatpush1.msra.mxu0 0.0
    %810 = vmatprep.subr.mxu0 0.0
    %811 = vmatpush1.msra.mxu0 0.0
    %812 = vmatprep.subr.mxu0 0.0
    %813 = vmatpush1.msra.mxu0 0.0
    %814 = vmatprep.subr.mxu0 0.0
    %815 = vmatpush1.msra.mxu0 0.0
    %816 = vmatprep.subr.mxu0 0.0
    %817 = vmatpush1.msra.mxu0 0.0
    %818 = vmatprep.subr.mxu0 0.0
    %819 = vmatpush1.msra.mxu0 0.0
    %820 = vmatprep.subr.mxu0 0.0
    %821 = vmatpush1.msra.mxu0 0.0
    %822 = vmatprep.subr.mxu0 0.0
    %823 = vmatpush1.msra.mxu0 0.0
    %824 = vmatprep.subr.mxu0 0.0
    %825 = vmatpush1.msra.mxu0 0.0
    %826 = vmatprep.subr.mxu0 0.0
    %827 = vmatpush1.msra.mxu0 0.0
    %828 = vmatprep.subr.mxu0 0.0
    %829 = vmatpush1.msra.mxu0 0.0
    %830 = vmatprep.subr.mxu0 0.0
    %831 = vmatpush1.msra.mxu0 0.0
    %832 = vmatprep.subr.mxu0 0.0
    %833 = vmatpush1.msra.mxu0 0.0
    %834 = vmatprep.subr.mxu0 0.0
    %835 = vmatpush1.msra.mxu0 0.0
    %836 = vmatprep.subr.mxu0 0.0
    %837 = vmatpush1.msra.mxu0 0.0
    %838 = vmatprep.subr.mxu0 0.0
    %839 = vmatpush1.msra.mxu0 0.0
    %840 = vmatprep.subr.mxu0 0.0
    %841 = vmatpush1.msra.mxu0 0.0
    %842 = vmatprep.subr.mxu0 0.0
    %843 = vmatpush1.msra.mxu0 0.0
    %844 = vmatprep.subr.mxu0 0.0
    %845 = vmatpush1.msra.mxu0 0.0
    %846 = vmatprep.subr.mxu0 0.0
    %847 = vmatpush1.msra.mxu0 0.0
    %848 = vmatprep.subr.mxu0 0.0
    %849 = vmatpush1.msra.mxu0 0.0
    %850 = vmatprep.subr.mxu0 0.0
    %851 = vmatpush1.msra.mxu0 0.0
    %852 = vmatprep.subr.mxu0 0.0
    %853 = vmatpush1.msra.mxu0 0.0
    %854 = vmatprep.subr.mxu0 0.0
    %855 = vmatpush1.msra.mxu0 0.0
    %856 = vmatprep.subr.mxu0 0.0
    %857 = vmatpush1.msra.mxu0 0.0
    %858 = vmatprep.subr.mxu0 0.0
    %859 = vmatpush1.msra.mxu0 0.0
    %860 = vmatprep.subr.mxu0 0.0
    %861 = vmatpush1.msra.mxu0 0.0
    %862 = vmatprep.subr.mxu0 0.0
    %863 = vmatpush1.msra.mxu0 0.0
    %864 = vmatprep.subr.mxu0 0.0
    %865 = vmatpush1.msra.mxu0 0.0
    %866 = vmatprep.subr.mxu0 0.0
    %867 = vmatpush1.msra.mxu0 0.0
    %868 = vmatprep.subr.mxu0 0.0
    %869 = vmatpush1.msra.mxu0 0.0
    %870 = vmatprep.mubr.f32.mxu0 0.0
    %871 = vmatmul.mubr.f32.gmra.mrb[0].mxu0 %v804
    %v872 = vpop.f32.mrb[0].mxu0
    %v873 = vadd.f32 0.0, %v872
    %v874 = vpop.f32.mrb[0].mxu0
    %875 = vdwg.mxu0
    %877 = vrot.lane.b32.xlu0 %v873, 24
    %v878 = vpop.permute.xlu0 %877
    %vm880 = vcmask 261312
    %881 = vst.msk [vmem:[#allocation2] sm:$0xff] %vm880, %v878
    %883 = vrot.lane.b32.xlu0 %v186, 96
    %v884 = vpop.permute.xlu0 %883
    %v885 = vsel %vm192, %v186, 0
    %v887 = vsel %vm192, %v884, 0
    %889 = vmatprep.subr.mxu0 0.0
    %890 = vmatpush1.xpose.msra.mxu0 %v887
    %891 = vmatprep.subr.mxu0 0.0
    %892 = vmatpush1.xpose.msra.mxu0 0.0
    %893 = vmatprep.subr.mxu0 0.0
    %894 = vmatpush1.xpose.msra.mxu0 0.0
    %895 = vmatprep.subr.mxu0 0.0
    %896 = vmatpush1.xpose.msra.mxu0 0.0
    %897 = vmatprep.subr.mxu0 0.0
    %898 = vmatpush1.xpose.msra.mxu0 0.0
    %899 = vmatprep.subr.mxu0 0.0
    %900 = vmatpush1.xpose.msra.mxu0 0.0
    %901 = vmatprep.subr.mxu0 0.0
    %902 = vmatpush1.xpose.msra.mxu0 0.0
    %903 = vmatprep.subr.mxu0 0.0
    %904 = vmatpush1.xpose.msra.mxu0 0.0
    %905 = vmatprep.subr.mxu0 0.0
    %906 = vmatpush1.xpose.msra.mxu0 0.0
    %907 = vmatprep.subr.mxu0 0.0
    %908 = vmatpush1.xpose.msra.mxu0 0.0
    %909 = vmatprep.subr.mxu0 0.0
    %910 = vmatpush1.xpose.msra.mxu0 0.0
    %911 = vmatprep.subr.mxu0 0.0
    %912 = vmatpush1.xpose.msra.mxu0 0.0
    %913 = vmatprep.subr.mxu0 0.0
    %914 = vmatpush1.xpose.msra.mxu0 0.0
    %915 = vmatprep.subr.mxu0 0.0
    %916 = vmatpush1.xpose.msra.mxu0 0.0
    %917 = vmatprep.subr.mxu0 0.0
    %918 = vmatpush1.xpose.msra.mxu0 0.0
    %919 = vmatprep.subr.mxu0 0.0
    %920 = vmatpush1.xpose.msra.mxu0 0.0
    %921 = vmatprep.subr.mxu0 0.0
    %922 = vmatpush1.xpose.msra.mxu0 0.0
    %923 = vmatprep.subr.mxu0 0.0
    %924 = vmatpush1.xpose.msra.mxu0 0.0
    %925 = vmatprep.subr.mxu0 0.0
    %926 = vmatpush1.xpose.msra.mxu0 0.0
    %927 = vmatprep.subr.mxu0 0.0
    %928 = vmatpush1.xpose.msra.mxu0 0.0
    %929 = vmatprep.subr.mxu0 0.0
    %930 = vmatpush1.xpose.msra.mxu0 0.0
    %931 = vmatprep.subr.mxu0 0.0
    %932 = vmatpush1.xpose.msra.mxu0 0.0
    %933 = vmatprep.subr.mxu0 0.0
    %934 = vmatpush1.xpose.msra.mxu0 0.0
    %935 = vmatprep.subr.mxu0 0.0
    %936 = vmatpush1.xpose.msra.mxu0 0.0
    %937 = vmatprep.subr.mxu0 0.0
    %938 = vmatpush1.xpose.msra.mxu0 0.0
    %939 = vmatprep.subr.mxu0 0.0
    %940 = vmatpush1.xpose.msra.mxu0 0.0
    %941 = vmatprep.subr.mxu0 0.0
    %942 = vmatpush1.xpose.msra.mxu0 0.0
    %943 = vmatprep.subr.mxu0 0.0
    %944 = vmatpush1.xpose.msra.mxu0 0.0
    %945 = vmatprep.subr.mxu0 0.0
    %946 = vmatpush1.xpose.msra.mxu0 0.0
    %947 = vmatprep.subr.mxu0 0.0
    %948 = vmatpush1.xpose.msra.mxu0 0.0
    %949 = vmatprep.subr.mxu0 0.0
    %950 = vmatpush1.xpose.msra.mxu0 0.0
    %951 = vmatprep.subr.mxu0 0.0
    %952 = vmatpush1.xpose.msra.mxu0 0.0
    %953 = vmatprep.mubr.f32.mxu0 0.0
    %954 = vmatmul.mubr.f32.gmra.mrb[0].mxu0 %v885
    %v955 = vpop.f32.mrb[0].mxu0
    %v956 = vadd.f32 0.0, %v955
    %v957 = vpop.f32.mrb[0].mxu0
    %958 = vdwg.mxu0
    %v959 = vmul.f32 %v956, 0.35355338
    %v961 = vlaneseq
    %v962 = vshrl.u32 %v961, 7
    %v963 = vsub.s32 0, %v962
    %v964 = vrot.slane %v44, %v963
    %v966 = vadd.f32 %v959, %v964
    %v967 = vsel %vm192, %v966, -inf
    %968 = vmax.xlane.f32.xlu0 %v967
    %v969 = vpop.xlane.xlu0 %968
    %v970 = vsub.f32 %v966, %v969
    %v971 = vmul.f32 %v970, 1.442695
    %v972 = vpow.pop %v971
    %v973 = vsel %vm192, %v972, 0.0
    %974 = vadd.xlane.f32.xlu0 %v973
    %v975 = vpop.xlane.xlu0 %974
    %v976 = vrcp.pop %v975
    %v977 = vmul.f32 %v972, %v976
    %978 = vrot.lane.b32.xlu0 %v186, 64
    %v979 = vpop.permute.xlu0 %978
    %v982 = vsel %vm192, %v977, 0
    %984 = vmatprep.subr.mxu0 0.0
    %985 = vmatpush1.msra.mxu0 %v979
    %986 = vmatprep.subr.mxu0 0.0
    %987 = vmatpush1.msra.mxu0 0.0
    %988 = vmatprep.subr.mxu0 0.0
    %989 = vmatpush1.msra.mxu0 0.0
    %990 = vmatprep.subr.mxu0 0.0
    %991 = vmatpush1.msra.mxu0 0.0
    %992 = vmatprep.subr.mxu0 0.0
    %993 = vmatpush1.msra.mxu0 0.0
    %994 = vmatprep.subr.mxu0 0.0
    %995 = vmatpush1.msra.mxu0 0.0
    %996 = vmatprep.subr.mxu0 0.0
    %997 = vmatpush1.msra.mxu0 0.0
    %998 = vmatprep.subr.mxu0 0.0
    %999 = vmatpush1.msra.mxu0 0.0
    %1000 = vmatprep.subr.mxu0 0.0
    %1001 = vmatpush1.msra.mxu0 0.0
    %1002 = vmatprep.subr.mxu0 0.0
    %1003 = vmatpush1.msra.mxu0 0.0
    %1004 = vmatprep.subr.mxu0 0.0
    %1005 = vmatpush1.msra.mxu0 0.0
    %1006 = vmatprep.subr.mxu0 0.0
    %1007 = vmatpush1.msra.mxu0 0.0
    %1008 = vmatprep.subr.mxu0 0.0
    %1009 = vmatpush1.msra.mxu0 0.0
    %1010 = vmatprep.subr.mxu0 0.0
    %1011 = vmatpush1.msra.mxu0 0.0
    %1012 = vmatprep.subr.mxu0 0.0
    %1013 = vmatpush1.msra.mxu0 0.0
    %1014 = vmatprep.subr.mxu0 0.0
    %1015 = vmatpush1.msra.mxu0 0.0
    %1016 = vmatprep.subr.mxu0 0.0
    %1017 = vmatpush1.msra.mxu0 0.0
    %1018 = vmatprep.subr.mxu0 0.0
    %1019 = vmatpush1.msra.mxu0 0.0
    %1020 = vmatprep.subr.mxu0 0.0
    %1021 = vmatpush1.msra.mxu0 0.0
    %1022 = vmatprep.subr.mxu0 0.0
    %1023 = vmatpush1.msra.mxu0 0.0
    %1024 = vmatprep.subr.mxu0 0.0
    %1025 = vmatpush1.msra.mxu0 0.0
    %1026 = vmatprep.subr.mxu0 0.0
    %1027 = vmatpush1.msra.mxu0 0.0
    %1028 = vmatprep.subr.mxu0 0.0
    %1029 = vmatpush1.msra.mxu0 0.0
    %1030 = vmatprep.subr.mxu0 0.0
    %1031 = vmatpush1.msra.mxu0 0.0
    %1032 = vmatprep.subr.mxu0 0.0
    %1033 = vmatpush1.msra.mxu0 0.0
    %1034 = vmatprep.subr.mxu0 0.0
    %1035 = vmatpush1.msra.mxu0 0.0
    %1036 = vmatprep.subr.mxu0 0.0
    %1037 = vmatpush1.msra.mxu0 0.0
    %1038 = vmatprep.subr.mxu0 0.0
    %1039 = vmatpush1.msra.mxu0 0.0
    %1040 = vmatprep.subr.mxu0 0.0
    %1041 = vmatpush1.msra.mxu0 0.0
    %1042 = vmatprep.subr.mxu0 0.0
    %1043 = vmatpush1.msra.mxu0 0.0
    %1044 = vmatprep.subr.mxu0 0.0
    %1045 = vmatpush1.msra.mxu0 0.0
    %1046 = vmatprep.subr.mxu0 0.0
    %1047 = vmatpush1.msra.mxu0 0.0
    %1048 = vmatprep.mubr.f32.mxu0 0.0
    %1049 = vmatmul.mubr.f32.gmra.mrb[0].mxu0 %v982
    %v1050 = vpop.f32.mrb[0].mxu0
    %v1051 = vadd.f32 0.0, %v1050
    %v1052 = vpop.f32.mrb[0].mxu0
    %1053 = vdwg.mxu0
    %1054 = vst.msk [vmem:[#allocation2 + $0x8] sm:$0xff] %vm192, %v1051
    %1055 = vrot.lane.b32.xlu0 %v186, 120
    %v1056 = vpop.permute.xlu0 %1055
    %1057 = vrot.lane.b32.xlu0 %v186, 88
    %v1058 = vpop.permute.xlu0 %1057
    %v1059 = vsel %vm192, %v1056, 0
    %v1061 = vsel %vm192, %v1058, 0
    %1063 = vmatprep.subr.mxu0 0.0
    %1064 = vmatpush1.xpose.msra.mxu0 %v1061
    %1065 = vmatprep.subr.mxu0 0.0
    %1066 = vmatpush1.xpose.msra.mxu0 0.0
    %1067 = vmatprep.subr.mxu0 0.0
    %1068 = vmatpush1.xpose.msra.mxu0 0.0
    %1069 = vmatprep.subr.mxu0 0.0
    %1070 = vmatpush1.xpose.msra.mxu0 0.0
    %1071 = vmatprep.subr.mxu0 0.0
    %1072 = vmatpush1.xpose.msra.mxu0 0.0
    %1073 = vmatprep.subr.mxu0 0.0
    %1074 = vmatpush1.xpose.msra.mxu0 0.0
    %1075 = vmatprep.subr.mxu0 0.0
    %1076 = vmatpush1.xpose.msra.mxu0 0.0
    %1077 = vmatprep.subr.mxu0 0.0
    %1078 = vmatpush1.xpose.msra.mxu0 0.0
    %1079 = vmatprep.subr.mxu0 0.0
    %1080 = vmatpush1.xpose.msra.mxu0 0.0
    %1081 = vmatprep.subr.mxu0 0.0
    %1082 = vmatpush1.xpose.msra.mxu0 0.0
    %1083 = vmatprep.subr.mxu0 0.0
    %1084 = vmatpush1.xpose.msra.mxu0 0.0
    %1085 = vmatprep.subr.mxu0 0.0
    %1086 = vmatpush1.xpose.msra.mxu0 0.0
    %1087 = vmatprep.subr.mxu0 0.0
    %1088 = vmatpush1.xpose.msra.mxu0 0.0
    %1089 = vmatprep.subr.mxu0 0.0
    %1090 = vmatpush1.xpose.msra.mxu0 0.0
    %1091 = vmatprep.subr.mxu0 0.0
    %1092 = vmatpush1.xpose.msra.mxu0 0.0
    %1093 = vmatprep.subr.mxu0 0.0
    %1094 = vmatpush1.xpose.msra.mxu0 0.0
    %1095 = vmatprep.subr.mxu0 0.0
    %1096 = vmatpush1.xpose.msra.mxu0 0.0
    %1097 = vmatprep.subr.mxu0 0.0
    %1098 = vmatpush1.xpose.msra.mxu0 0.0
    %1099 = vmatprep.subr.mxu0 0.0
    %1100 = vmatpush1.xpose.msra.mxu0 0.0
    %1101 = vmatprep.subr.mxu0 0.0
    %1102 = vmatpush1.xpose.msra.mxu0 0.0
    %1103 = vmatprep.subr.mxu0 0.0
    %1104 = vmatpush1.xpose.msra.mxu0 0.0
    %1105 = vmatprep.subr.mxu0 0.0
    %1106 = vmatpush1.xpose.msra.mxu0 0.0
    %1107 = vmatprep.subr.mxu0 0.0
    %1108 = vmatpush1.xpose.msra.mxu0 0.0
    %1109 = vmatprep.subr.mxu0 0.0
    %1110 = vmatpush1.xpose.msra.mxu0 0.0
    %1111 = vmatprep.subr.mxu0 0.0
    %1112 = vmatpush1.xpose.msra.mxu0 0.0
    %1113 = vmatprep.subr.mxu0 0.0
    %1114 = vmatpush1.xpose.msra.mxu0 0.0
    %1115 = vmatprep.subr.mxu0 0.0
    %1116 = vmatpush1.xpose.msra.mxu0 0.0
    %1117 = vmatprep.subr.mxu0 0.0
    %1118 = vmatpush1.xpose.msra.mxu0 0.0
    %1119 = vmatprep.subr.mxu0 0.0
    %1120 = vmatpush1.xpose.msra.mxu0 0.0
    %1121 = vmatprep.subr.mxu0 0.0
    %1122 = vmatpush1.xpose.msra.mxu0 0.0
    %1123 = vmatprep.subr.mxu0 0.0
    %1124 = vmatpush1.xpose.msra.mxu0 0.0
    %1125 = vmatprep.subr.mxu0 0.0
    %1126 = vmatpush1.xpose.msra.mxu0 0.0
    %1127 = vmatprep.mubr.f32.mxu0 0.0
    %1128 = vmatmul.mubr.f32.gmra.mrb[0].mxu0 %v1059
    %v1129 = vpop.f32.mrb[0].mxu0
    %v1130 = vadd.f32 0.0, %v1129
    %v1131 = vpop.f32.mrb[0].mxu0
    %1132 = vdwg.mxu0
    %v1133 = vmul.f32 %v1130, 0.35355338
    %v1134 = vadd.f32 %v1133, %v964
    %v1135 = vsel %vm192, %v1134, -inf
    %1136 = vmax.xlane.f32.xlu0 %v1135
    %v1137 = vpop.xlane.xlu0 %1136
    %v1138 = vsub.f32 %v1134, %v1137
    %v1139 = vmul.f32 %v1138, 1.442695
    %v1140 = vpow.pop %v1139
    %v1141 = vsel %vm192, %v1140, 0.0
    %1142 = vadd.xlane.f32.xlu0 %v1141
    %v1143 = vpop.xlane.xlu0 %1142
    %v1144 = vrcp.pop %v1143
    %v1145 = vmul.f32 %v1140, %v1144
    %1146 = vrot.lane.b32.xlu0 %v186, 56
    %v1147 = vpop.permute.xlu0 %1146
    %v1150 = vsel %vm192, %v1145, 0
    %1152 = vmatprep.subr.mxu0 0.0
    %1153 = vmatpush1.msra.mxu0 %v1147
    %1154 = vmatprep.subr.mxu0 0.0
    %1155 = vmatpush1.msra.mxu0 0.0
    %1156 = vmatprep.subr.mxu0 0.0
    %1157 = vmatpush1.msra.mxu0 0.0
    %1158 = vmatprep.subr.mxu0 0.0
    %1159 = vmatpush1.msra.mxu0 0.0
    %1160 = vmatprep.subr.mxu0 0.0
    %1161 = vmatpush1.msra.mxu0 0.0
    %1162 = vmatprep.subr.mxu0 0.0
    %1163 = vmatpush1.msra.mxu0 0.0
    %1164 = vmatprep.subr.mxu0 0.0
    %1165 = vmatpush1.msra.mxu0 0.0
    %1166 = vmatprep.subr.mxu0 0.0
    %1167 = vmatpush1.msra.mxu0 0.0
    %1168 = vmatprep.subr.mxu0 0.0
    %1169 = vmatpush1.msra.mxu0 0.0
    %1170 = vmatprep.subr.mxu0 0.0
    %1171 = vmatpush1.msra.mxu0 0.0
    %1172 = vmatprep.subr.mxu0 0.0
    %1173 = vmatpush1.msra.mxu0 0.0
    %1174 = vmatprep.subr.mxu0 0.0
    %1175 = vmatpush1.msra.mxu0 0.0
    %1176 = vmatprep.subr.mxu0 0.0
    %1177 = vmatpush1.msra.mxu0 0.0
    %1178 = vmatprep.subr.mxu0 0.0
    %1179 = vmatpush1.msra.mxu0 0.0
    %1180 = vmatprep.subr.mxu0 0.0
    %1181 = vmatpush1.msra.mxu0 0.0
    %1182 = vmatprep.subr.mxu0 0.0
    %1183 = vmatpush1.msra.mxu0 0.0
    %1184 = vmatprep.subr.mxu0 0.0
    %1185 = vmatpush1.msra.mxu0 0.0
    %1186 = vmatprep.subr.mxu0 0.0
    %1187 = vmatpush1.msra.mxu0 0.0
    %1188 = vmatprep.subr.mxu0 0.0
    %1189 = vmatpush1.msra.mxu0 0.0
    %1190 = vmatprep.subr.mxu0 0.0
    %1191 = vmatpush1.msra.mxu0 0.0
    %1192 = vmatprep.subr.mxu0 0.0
    %1193 = vmatpush1.msra.mxu0 0.0
    %1194 = vmatprep.subr.mxu0 0.0
    %1195 = vmatpush1.msra.mxu0 0.0
    %1196 = vmatprep.subr.mxu0 0.0
    %1197 = vmatpush1.msra.mxu0 0.0
    %1198 = vmatprep.subr.mxu0 0.0
    %1199 = vmatpush1.msra.mxu0 0.0
    %1200 = vmatprep.subr.mxu0 0.0
    %1201 = vmatpush1.msra.mxu0 0.0
    %1202 = vmatprep.subr.mxu0 0.0
    %1203 = vmatpush1.msra.mxu0 0.0
    %1204 = vmatprep.subr.mxu0 0.0
    %1205 = vmatpush1.msra.mxu0 0.0
    %1206 = vmatprep.subr.mxu0 0.0
    %1207 = vmatpush1.msra.mxu0 0.0
    %1208 = vmatprep.subr.mxu0 0.0
    %1209 = vmatpush1.msra.mxu0 0.0
    %1210 = vmatprep.subr.mxu0 0.0
    %1211 = vmatpush1.msra.mxu0 0.0
    %1212 = vmatprep.subr.mxu0 0.0
    %1213 = vmatpush1.msra.mxu0 0.0
    %1214 = vmatprep.subr.mxu0 0.0
    %1215 = vmatpush1.msra.mxu0 0.0
    %1216 = vmatprep.mubr.f32.mxu0 0.0
    %1217 = vmatmul.mubr.f32.gmra.mrb[0].mxu0 %v1150
    %v1218 = vpop.f32.mrb[0].mxu0
    %v1219 = vadd.f32 0.0, %v1218
    %v1220 = vpop.f32.mrb[0].mxu0
    %1221 = vdwg.mxu0
    %1223 = vrot.lane.b32.xlu0 %v1219, 8
    %v1224 = vpop.permute.xlu0 %1223
    %1226 = vst.msk [vmem:[#allocation2 + $0x8] sm:$0xff] %vm534, %v1224
    %1227 = vrot.lane.b32.xlu0 %v186, 112
    %v1228 = vpop.permute.xlu0 %1227
    %1229 = vrot.lane.b32.xlu0 %v186, 80
    %v1230 = vpop.permute.xlu0 %1229
    %v1231 = vsel %vm192, %v1228, 0
    %v1233 = vsel %vm192, %v1230, 0
    %1235 = vmatprep.subr.mxu0 0.0
    %1236 = vmatpush1.xpose.msra.mxu0 %v1233
    %1237 = vmatprep.subr.mxu0 0.0
    %1238 = vmatpush1.xpose.msra.mxu0 0.0
    %1239 = vmatprep.subr.mxu0 0.0
    %1240 = vmatpush1.xpose.msra.mxu0 0.0
    %1241 = vmatprep.subr.mxu0 0.0
    %1242 = vmatpush1.xpose.msra.mxu0 0.0
    %1243 = vmatprep.subr.mxu0 0.0
    %1244 = vmatpush1.xpose.msra.mxu0 0.0
    %1245 = vmatprep.subr.mxu0 0.0
    %1246 = vmatpush1.xpose.msra.mxu0 0.0
    %1247 = vmatprep.subr.mxu0 0.0
    %1248 = vmatpush1.xpose.msra.mxu0 0.0
    %1249 = vmatprep.subr.mxu0 0.0
    %1250 = vmatpush1.xpose.msra.mxu0 0.0
    %1251 = vmatprep.subr.mxu0 0.0
    %1252 = vmatpush1.xpose.msra.mxu0 0.0
    %1253 = vmatprep.subr.mxu0 0.0
    %1254 = vmatpush1.xpose.msra.mxu0 0.0
    %1255 = vmatprep.subr.mxu0 0.0
    %1256 = vmatpush1.xpose.msra.mxu0 0.0
    %1257 = vmatprep.subr.mxu0 0.0
    %1258 = vmatpush1.xpose.msra.mxu0 0.0
    %1259 = vmatprep.subr.mxu0 0.0
    %1260 = vmatpush1.xpose.msra.mxu0 0.0
    %1261 = vmatprep.subr.mxu0 0.0
    %1262 = vmatpush1.xpose.msra.mxu0 0.0
    %1263 = vmatprep.subr.mxu0 0.0
    %1264 = vmatpush1.xpose.msra.mxu0 0.0
    %1265 = vmatprep.subr.mxu0 0.0
    %1266 = vmatpush1.xpose.msra.mxu0 0.0
    %1267 = vmatprep.subr.mxu0 0.0
    %1268 = vmatpush1.xpose.msra.mxu0 0.0
    %1269 = vmatprep.subr.mxu0 0.0
    %1270 = vmatpush1.xpose.msra.mxu0 0.0
    %1271 = vmatprep.subr.mxu0 0.0
    %1272 = vmatpush1.xpose.msra.mxu0 0.0
    %1273 = vmatprep.subr.mxu0 0.0
    %1274 = vmatpush1.xpose.msra.mxu0 0.0
    %1275 = vmatprep.subr.mxu0 0.0
    %1276 = vmatpush1.xpose.msra.mxu0 0.0
    %1277 = vmatprep.subr.mxu0 0.0
    %1278 = vmatpush1.xpose.msra.mxu0 0.0
    %1279 = vmatprep.subr.mxu0 0.0
    %1280 = vmatpush1.xpose.msra.mxu0 0.0
    %1281 = vmatprep.subr.mxu0 0.0
    %1282 = vmatpush1.xpose.msra.mxu0 0.0
    %1283 = vmatprep.subr.mxu0 0.0
    %1284 = vmatpush1.xpose.msra.mxu0 0.0
    %1285 = vmatprep.subr.mxu0 0.0
    %1286 = vmatpush1.xpose.msra.mxu0 0.0
    %1287 = vmatprep.subr.mxu0 0.0
    %1288 = vmatpush1.xpose.msra.mxu0 0.0
    %1289 = vmatprep.subr.mxu0 0.0
    %1290 = vmatpush1.xpose.msra.mxu0 0.0
    %1291 = vmatprep.subr.mxu0 0.0
    %1292 = vmatpush1.xpose.msra.mxu0 0.0
    %1293 = vmatprep.subr.mxu0 0.0
    %1294 = vmatpush1.xpose.msra.mxu0 0.0
    %1295 = vmatprep.subr.mxu0 0.0
    %1296 = vmatpush1.xpose.msra.mxu0 0.0
    %1297 = vmatprep.subr.mxu0 0.0
    %1298 = vmatpush1.xpose.msra.mxu0 0.0
    %1299 = vmatprep.mubr.f32.mxu0 0.0
    %1300 = vmatmul.mubr.f32.gmra.mrb[0].mxu0 %v1231
    %v1301 = vpop.f32.mrb[0].mxu0
    %v1302 = vadd.f32 0.0, %v1301
    %v1303 = vpop.f32.mrb[0].mxu0
    %1304 = vdwg.mxu0
    %v1305 = vmul.f32 %v1302, 0.35355338
    %v1306 = vadd.f32 %v1305, %v964
    %v1307 = vsel %vm192, %v1306, -inf
    %1308 = vmax.xlane.f32.xlu0 %v1307
    %v1309 = vpop.xlane.xlu0 %1308
    %v1310 = vsub.f32 %v1306, %v1309
    %v1311 = vmul.f32 %v1310, 1.442695
    %v1312 = vpow.pop %v1311
    %v1313 = vsel %vm192, %v1312, 0.0
    %1314 = vadd.xlane.f32.xlu0 %v1313
    %v1315 = vpop.xlane.xlu0 %1314
    %v1316 = vrcp.pop %v1315
    %v1317 = vmul.f32 %v1312, %v1316
    %1318 = vrot.lane.b32.xlu0 %v186, 48
    %v1319 = vpop.permute.xlu0 %1318
    %v1322 = vsel %vm192, %v1317, 0
    %1324 = vmatprep.subr.mxu0 0.0
    %1325 = vmatpush1.msra.mxu0 %v1319
    %1326 = vmatprep.subr.mxu0 0.0
    %1327 = vmatpush1.msra.mxu0 0.0
    %1328 = vmatprep.subr.mxu0 0.0
    %1329 = vmatpush1.msra.mxu0 0.0
    %1330 = vmatprep.subr.mxu0 0.0
    %1331 = vmatpush1.msra.mxu0 0.0
    %1332 = vmatprep.subr.mxu0 0.0
    %1333 = vmatpush1.msra.mxu0 0.0
    %1334 = vmatprep.subr.mxu0 0.0
    %1335 = vmatpush1.msra.mxu0 0.0
    %1336 = vmatprep.subr.mxu0 0.0
    %1337 = vmatpush1.msra.mxu0 0.0
    %1338 = vmatprep.subr.mxu0 0.0
    %1339 = vmatpush1.msra.mxu0 0.0
    %1340 = vmatprep.subr.mxu0 0.0
    %1341 = vmatpush1.msra.mxu0 0.0
    %1342 = vmatprep.subr.mxu0 0.0
    %1343 = vmatpush1.msra.mxu0 0.0
    %1344 = vmatprep.subr.mxu0 0.0
    %1345 = vmatpush1.msra.mxu0 0.0
    %1346 = vmatprep.subr.mxu0 0.0
    %1347 = vmatpush1.msra.mxu0 0.0
    %1348 = vmatprep.subr.mxu0 0.0
    %1349 = vmatpush1.msra.mxu0 0.0
    %1350 = vmatprep.subr.mxu0 0.0
    %1351 = vmatpush1.msra.mxu0 0.0
    %1352 = vmatprep.subr.mxu0 0.0
    %1353 = vmatpush1.msra.mxu0 0.0
    %1354 = vmatprep.subr.mxu0 0.0
    %1355 = vmatpush1.msra.mxu0 0.0
    %1356 = vmatprep.subr.mxu0 0.0
    %1357 = vmatpush1.msra.mxu0 0.0
    %1358 = vmatprep.subr.mxu0 0.0
    %1359 = vmatpush1.msra.mxu0 0.0
    %1360 = vmatprep.subr.mxu0 0.0
    %1361 = vmatpush1.msra.mxu0 0.0
    %1362 = vmatprep.subr.mxu0 0.0
    %1363 = vmatpush1.msra.mxu0 0.0
    %1364 = vmatprep.subr.mxu0 0.0
    %1365 = vmatpush1.msra.mxu0 0.0
    %1366 = vmatprep.subr.mxu0 0.0
    %1367 = vmatpush1.msra.mxu0 0.0
    %1368 = vmatprep.subr.mxu0 0.0
    %1369 = vmatpush1.msra.mxu0 0.0
    %1370 = vmatprep.subr.mxu0 0.0
    %1371 = vmatpush1.msra.mxu0 0.0
    %1372 = vmatprep.subr.mxu0 0.0
    %1373 = vmatpush1.msra.mxu0 0.0
    %1374 = vmatprep.subr.mxu0 0.0
    %1375 = vmatpush1.msra.mxu0 0.0
    %1376 = vmatprep.subr.mxu0 0.0
    %1377 = vmatpush1.msra.mxu0 0.0
    %1378 = vmatprep.subr.mxu0 0.0
    %1379 = vmatpush1.msra.mxu0 0.0
    %1380 = vmatprep.subr.mxu0 0.0
    %1381 = vmatpush1.msra.mxu0 0.0
    %1382 = vmatprep.subr.mxu0 0.0
    %1383 = vmatpush1.msra.mxu0 0.0
    %1384 = vmatprep.subr.mxu0 0.0
    %1385 = vmatpush1.msra.mxu0 0.0
    %1386 = vmatprep.subr.mxu0 0.0
    %1387 = vmatpush1.msra.mxu0 0.0
    %1388 = vmatprep.mubr.f32.mxu0 0.0
    %1389 = vmatmul.mubr.f32.gmra.mrb[0].mxu0 %v1322
    %v1390 = vpop.f32.mrb[0].mxu0
    %v1391 = vadd.f32 0.0, %v1390
    %v1392 = vpop.f32.mrb[0].mxu0
    %1393 = vdwg.mxu0
    %1395 = vrot.lane.b32.xlu0 %v1391, 16
    %v1396 = vpop.permute.xlu0 %1395
    %1398 = vst.msk [vmem:[#allocation2 + $0x8] sm:$0xff] %vm707, %v1396
    %1399 = vrot.lane.b32.xlu0 %v186, 104
    %v1400 = vpop.permute.xlu0 %1399
    %1401 = vrot.lane.b32.xlu0 %v186, 72
    %v1402 = vpop.permute.xlu0 %1401
    %v1403 = vsel %vm192, %v1400, 0
    %v1405 = vsel %vm192, %v1402, 0
    %1407 = vmatprep.subr.mxu0 0.0
    %1408 = vmatpush1.xpose.msra.mxu0 %v1405
    %1409 = vmatprep.subr.mxu0 0.0
    %1410 = vmatpush1.xpose.msra.mxu0 0.0
    %1411 = vmatprep.subr.mxu0 0.0
    %1412 = vmatpush1.xpose.msra.mxu0 0.0
    %1413 = vmatprep.subr.mxu0 0.0
    %1414 = vmatpush1.xpose.msra.mxu0 0.0
    %1415 = vmatprep.subr.mxu0 0.0
    %1416 = vmatpush1.xpose.msra.mxu0 0.0
    %1417 = vmatprep.subr.mxu0 0.0
    %1418 = vmatpush1.xpose.msra.mxu0 0.0
    %1419 = vmatprep.subr.mxu0 0.0
    %1420 = vmatpush1.xpose.msra.mxu0 0.0
    %1421 = vmatprep.subr.mxu0 0.0
    %1422 = vmatpush1.xpose.msra.mxu0 0.0
    %1423 = vmatprep.subr.mxu0 0.0
    %1424 = vmatpush1.xpose.msra.mxu0 0.0
    %1425 = vmatprep.subr.mxu0 0.0
    %1426 = vmatpush1.xpose.msra.mxu0 0.0
    %1427 = vmatprep.subr.mxu0 0.0
    %1428 = vmatpush1.xpose.msra.mxu0 0.0
    %1429 = vmatprep.subr.mxu0 0.0
    %1430 = vmatpush1.xpose.msra.mxu0 0.0
    %1431 = vmatprep.subr.mxu0 0.0
    %1432 = vmatpush1.xpose.msra.mxu0 0.0
    %1433 = vmatprep.subr.mxu0 0.0
    %1434 = vmatpush1.xpose.msra.mxu0 0.0
    %1435 = vmatprep.subr.mxu0 0.0
    %1436 = vmatpush1.xpose.msra.mxu0 0.0
    %1437 = vmatprep.subr.mxu0 0.0
    %1438 = vmatpush1.xpose.msra.mxu0 0.0
    %1439 = vmatprep.subr.mxu0 0.0
    %1440 = vmatpush1.xpose.msra.mxu0 0.0
    %1441 = vmatprep.subr.mxu0 0.0
    %1442 = vmatpush1.xpose.msra.mxu0 0.0
    %1443 = vmatprep.subr.mxu0 0.0
    %1444 = vmatpush1.xpose.msra.mxu0 0.0
    %1445 = vmatprep.subr.mxu0 0.0
    %1446 = vmatpush1.xpose.msra.mxu0 0.0
    %1447 = vmatprep.subr.mxu0 0.0
    %1448 = vmatpush1.xpose.msra.mxu0 0.0
    %1449 = vmatprep.subr.mxu0 0.0
    %1450 = vmatpush1.xpose.msra.mxu0 0.0
    %1451 = vmatprep.subr.mxu0 0.0
    %1452 = vmatpush1.xpose.msra.mxu0 0.0
    %1453 = vmatprep.subr.mxu0 0.0
    %1454 = vmatpush1.xpose.msra.mxu0 0.0
    %1455 = vmatprep.subr.mxu0 0.0
    %1456 = vmatpush1.xpose.msra.mxu0 0.0
    %1457 = vmatprep.subr.mxu0 0.0
    %1458 = vmatpush1.xpose.msra.mxu0 0.0
    %1459 = vmatprep.subr.mxu0 0.0
    %1460 = vmatpush1.xpose.msra.mxu0 0.0
    %1461 = vmatprep.subr.mxu0 0.0
    %1462 = vmatpush1.xpose.msra.mxu0 0.0
    %1463 = vmatprep.subr.mxu0 0.0
    %1464 = vmatpush1.xpose.msra.mxu0 0.0
    %1465 = vmatprep.subr.mxu0 0.0
    %1466 = vmatpush1.xpose.msra.mxu0 0.0
    %1467 = vmatprep.subr.mxu0 0.0
    %1468 = vmatpush1.xpose.msra.mxu0 0.0
    %1469 = vmatprep.subr.mxu0 0.0
    %1470 = vmatpush1.xpose.msra.mxu0 0.0
    %1471 = vmatprep.mubr.f32.mxu0 0.0
    %1472 = vmatmul.mubr.f32.gmra.mrb[0].mxu0 %v1403
    %v1473 = vpop.f32.mrb[0].mxu0
    %v1474 = vadd.f32 0.0, %v1473
    %v1475 = vpop.f32.mrb[0].mxu0
    %1476 = vdwg.mxu0
    %v1477 = vmul.f32 %v1474, 0.35355338
    %v1478 = vadd.f32 %v1477, %v964
    %v1479 = vsel %vm192, %v1478, -inf
    %1480 = vmax.xlane.f32.xlu0 %v1479
    %v1481 = vpop.xlane.xlu0 %1480
    %v1482 = vsub.f32 %v1478, %v1481
    %v1483 = vmul.f32 %v1482, 1.442695
    %v1484 = vpow.pop %v1483
    %v1485 = vsel %vm192, %v1484, 0.0
    %1486 = vadd.xlane.f32.xlu0 %v1485
    %v1487 = vpop.xlane.xlu0 %1486
    %v1488 = vrcp.pop %v1487
    %v1489 = vmul.f32 %v1484, %v1488
    %1490 = vrot.lane.b32.xlu0 %v186, 40
    %v1491 = vpop.permute.xlu0 %1490
    %v1494 = vsel %vm192, %v1489, 0
    %1496 = vmatprep.subr.mxu0 0.0
    %1497 = vmatpush1.msra.mxu0 %v1491
    %1498 = vmatprep.subr.mxu0 0.0
    %1499 = vmatpush1.msra.mxu0 0.0
    %1500 = vmatprep.subr.mxu0 0.0
    %1501 = vmatpush1.msra.mxu0 0.0
    %1502 = vmatprep.subr.mxu0 0.0
    %1503 = vmatpush1.msra.mxu0 0.0
    %1504 = vmatprep.subr.mxu0 0.0
    %1505 = vmatpush1.msra.mxu0 0.0
    %1506 = vmatprep.subr.mxu0 0.0
    %1507 = vmatpush1.msra.mxu0 0.0
    %1508 = vmatprep.subr.mxu0 0.0
    %1509 = vmatpush1.msra.mxu0 0.0
    %1510 = vmatprep.subr.mxu0 0.0
    %1511 = vmatpush1.msra.mxu0 0.0
    %1512 = vmatprep.subr.mxu0 0.0
    %1513 = vmatpush1.msra.mxu0 0.0
    %1514 = vmatprep.subr.mxu0 0.0
    %1515 = vmatpush1.msra.mxu0 0.0
    %1516 = vmatprep.subr.mxu0 0.0
    %1517 = vmatpush1.msra.mxu0 0.0
    %1518 = vmatprep.subr.mxu0 0.0
    %1519 = vmatpush1.msra.mxu0 0.0
    %1520 = vmatprep.subr.mxu0 0.0
    %1521 = vmatpush1.msra.mxu0 0.0
    %1522 = vmatprep.subr.mxu0 0.0
    %1523 = vmatpush1.msra.mxu0 0.0
    %1524 = vmatprep.subr.mxu0 0.0
    %1525 = vmatpush1.msra.mxu0 0.0
    %1526 = vmatprep.subr.mxu0 0.0
    %1527 = vmatpush1.msra.mxu0 0.0
    %1528 = vmatprep.subr.mxu0 0.0
    %1529 = vmatpush1.msra.mxu0 0.0
    %1530 = vmatprep.subr.mxu0 0.0
    %1531 = vmatpush1.msra.mxu0 0.0
    %1532 = vmatprep.subr.mxu0 0.0
    %1533 = vmatpush1.msra.mxu0 0.0
    %1534 = vmatprep.subr.mxu0 0.0
    %1535 = vmatpush1.msra.mxu0 0.0
    %1536 = vmatprep.subr.mxu0 0.0
    %1537 = vmatpush1.msra.mxu0 0.0
    %1538 = vmatprep.subr.mxu0 0.0
    %1539 = vmatpush1.msra.mxu0 0.0
    %1540 = vmatprep.subr.mxu0 0.0
    %1541 = vmatpush1.msra.mxu0 0.0
    %1542 = vmatprep.subr.mxu0 0.0
    %1543 = vmatpush1.msra.mxu0 0.0
    %1544 = vmatprep.subr.mxu0 0.0
    %1545 = vmatpush1.msra.mxu0 0.0
    %1546 = vmatprep.subr.mxu0 0.0
    %1547 = vmatpush1.msra.mxu0 0.0
    %1548 = vmatprep.subr.mxu0 0.0
    %1549 = vmatpush1.msra.mxu0 0.0
    %1550 = vmatprep.subr.mxu0 0.0
    %1551 = vmatpush1.msra.mxu0 0.0
    %1552 = vmatprep.subr.mxu0 0.0
    %1553 = vmatpush1.msra.mxu0 0.0
    %1554 = vmatprep.subr.mxu0 0.0
    %1555 = vmatpush1.msra.mxu0 0.0
    %1556 = vmatprep.subr.mxu0 0.0
    %1557 = vmatpush1.msra.mxu0 0.0
    %1558 = vmatprep.subr.mxu0 0.0
    %1559 = vmatpush1.msra.mxu0 0.0
    %1560 = vmatprep.mubr.f32.mxu0 0.0
    %1561 = vmatmul.mubr.f32.gmra.mrb[0].mxu0 %v1494
    %v1562 = vpop.f32.mrb[0].mxu0
    %v1563 = vadd.f32 0.0, %v1562
    %v1564 = vpop.f32.mrb[0].mxu0
    %1565 = vdwg.mxu0
    %1567 = vrot.lane.b32.xlu0 %v1563, 24
    %v1568 = vpop.permute.xlu0 %1567
    %1570 = vst.msk [vmem:[#allocation2 + $0x8] sm:$0xff] %vm880, %v1568
    %v1571 = vld [vmem:[#allocation2] sm:$0xff]
    %v1572 = vld [vmem:[#allocation2 + $0x8] sm:$0xff]
    %v1573 = vld [vmem:[%s3] sm:$0xff]
    %v1574 = vld [vmem:[%s3 + $0x8] sm:$0xff]
    %v1575 = vld [vmem:[%s3 + $0x10] sm:$0xff]
    %v1576 = vld [vmem:[%s3 + $0x18] sm:$0xff]
    %v1577 = vlaneseq
    %v1578 = vshrl.u32 %v1577, 7
    %v1579 = vsub.s32 2, %v1578
    %v1580 = vrot.slane %v45, %v1579
    %v1582 = vsel %vm46, %v1571, 0
    %v1585 = vsel %vm46, %v1572, 0
    %1587 = vmatprep.subr.mxu0 0.0
    %1588 = vmatpush1.msra.mxu0 %v1573
    %1589 = vmatprep.subr.mxu0 0.0
    %1590 = vmatpush1.msra.mxu0 %v1574
    %1591 = vmatprep.subr.mxu0 0.0
    %1592 = vmatpush1.msra.mxu0 %v1575
    %1593 = vmatprep.subr.mxu0 0.0
    %1594 = vmatpush1.msra.mxu0 %v1576
    %1595 = vmatprep.subr.mxu0 0.0
    %1596 = vmatpush1.msra.mxu0 0.0
    %1597 = vmatprep.subr.mxu0 0.0
    %1598 = vmatpush1.msra.mxu0 0.0
    %1599 = vmatprep.subr.mxu0 0.0
    %1600 = vmatpush1.msra.mxu0 0.0
    %1601 = vmatprep.subr.mxu0 0.0
    %1602 = vmatpush1.msra.mxu0 0.0
    %1603 = vmatprep.subr.mxu0 0.0
    %1604 = vmatpush1.msra.mxu0 0.0
    %1605 = vmatprep.subr.mxu0 0.0
    %1606 = vmatpush1.msra.mxu0 0.0
    %1607 = vmatprep.subr.mxu0 0.0
    %1608 = vmatpush1.msra.mxu0 0.0
    %1609 = vmatprep.subr.mxu0 0.0
    %1610 = vmatpush1.msra.mxu0 0.0
    %1611 = vmatprep.subr.mxu0 0.0
    %1612 = vmatpush1.msra.mxu0 0.0
    %1613 = vmatprep.subr.mxu0 0.0
    %1614 = vmatpush1.msra.mxu0 0.0
    %1615 = vmatprep.subr.mxu0 0.0
    %1616 = vmatpush1.msra.mxu0 0.0
    %1617 = vmatprep.subr.mxu0 0.0
    %1618 = vmatpush1.msra.mxu0 0.0
    %1619 = vmatprep.subr.mxu0 0.0
    %1620 = vmatpush1.msra.mxu0 0.0
    %1621 = vmatprep.subr.mxu0 0.0
    %1622 = vmatpush1.msra.mxu0 0.0
    %1623 = vmatprep.subr.mxu0 0.0
    %1624 = vmatpush1.msra.mxu0 0.0
    %1625 = vmatprep.subr.mxu0 0.0
    %1626 = vmatpush1.msra.mxu0 0.0
    %1627 = vmatprep.subr.mxu0 0.0
    %1628 = vmatpush1.msra.mxu0 0.0
    %1629 = vmatprep.subr.mxu0 0.0
    %1630 = vmatpush1.msra.mxu0 0.0
    %1631 = vmatprep.subr.mxu0 0.0
    %1632 = vmatpush1.msra.mxu0 0.0
    %1633 = vmatprep.subr.mxu0 0.0
    %1634 = vmatpush1.msra.mxu0 0.0
    %1635 = vmatprep.subr.mxu0 0.0
    %1636 = vmatpush1.msra.mxu0 0.0
    %1637 = vmatprep.subr.mxu0 0.0
    %1638 = vmatpush1.msra.mxu0 0.0
    %1639 = vmatprep.subr.mxu0 0.0
    %1640 = vmatpush1.msra.mxu0 0.0
    %1641 = vmatprep.subr.mxu0 0.0
    %1642 = vmatpush1.msra.mxu0 0.0
    %1643 = vmatprep.subr.mxu0 0.0
    %1644 = vmatpush1.msra.mxu0 0.0
    %1645 = vmatprep.subr.mxu0 0.0
    %1646 = vmatpush1.msra.mxu0 0.0
    %1647 = vmatprep.subr.mxu0 0.0
    %1648 = vmatpush1.msra.mxu0 0.0
    %1649 = vmatprep.subr.mxu0 0.0
    %1650 = vmatpush1.msra.mxu0 0.0
    %1651 = vmatprep.mubr.f32.mxu0 0.0
    %1652 = vmatmul.mubr.f32.gmra.mrb[0].mxu0 %v1582
    %v1653 = vpop.f32.mrb[0].mxu0
    %v1654 = vadd.f32 %v1580, %v1653
    %v1655 = vpop.f32.mrb[0].mxu0
    %1656 = vmatprep.mubr.f32.mxu0 0.0
    %1657 = vmatmul.mubr.f32.gmra.mrb[0].mxu0 %v1585
    %v1658 = vpop.f32.mrb[0].mxu0
    %v1659 = vadd.f32 %v1580, %v1658
    %v1660 = vpop.f32.mrb[0].mxu0
    %1661 = vdwg.mxu0
    %v1662 = vadd.f32 %v41, %v1654
    %v1663 = vadd.f32 %v42, %v1659
    %v1664 = vsel %vm46, %v1662, 0.0
    %1665 = vadd.xlane.f32.xlu0 %v1664
    %v1666 = vpop.xlane.xlu0 %1665
    %v1667 = vsel %vm46, %v1663, 0.0
    %1668 = vadd.xlane.f32.xlu0 %v1667
    %v1669 = vpop.xlane.xlu0 %1668
    %v1670 = vmul.f32 %v1666, %v53
    %v1671 = vmul.f32 %v1669, %v53
    %v1672 = vsub.f32 %v1662, %v1670
    %v1673 = vsub.f32 %v1663, %v1671
    %v1674 = vmul.f32 %v1672, %v1672
    %v1675 = vmul.f32 %v1673, %v1673
    %v1676 = vsel %vm46, %v1674, 0.0
    %1677 = vadd.xlane.f32.xlu0 %v1676
    %v1678 = vpop.xlane.xlu0 %1677
    %v1679 = vsel %vm46, %v1675, 0.0
    %1680 = vadd.xlane.f32.xlu0 %v1679
    %v1681 = vpop.xlane.xlu0 %1680
    %v1682 = vmul.f32 %v1678, 0.032258064
    %v1683 = vmul.f32 %v1681, 0.032258064
    %v1684 = vrsqrt.pop %v1682
    %v1685 = vmul.f32 %v1682, %v1684
    %vm1686 = vcmp.eq.f32.partialorder %v1682, inf
    %v1687 = vsel %vm1686, %v1682, %v1685
    %vm1688 = vcmp.eq.f32.partialorder %v1682, 0.0
    %v1689 = vand.u32 %v1682, 2147483648
    %v1690 = vsel %vm1688, %v1689, %v1687
    %v1691 = vrsqrt.pop %v1683
    %v1692 = vmul.f32 %v1683, %v1691
    %vm1693 = vcmp.eq.f32.partialorder %v1683, inf
    %v1694 = vsel %vm1693, %v1683, %v1692
    %vm1695 = vcmp.eq.f32.partialorder %v1683, 0.0
    %v1696 = vand.u32 %v1683, 2147483648
    %v1697 = vsel %vm1695, %v1696, %v1694
    %v1698 = vadd.f32 %v1690, 1e-06
    %v1699 = vadd.f32 %v1697, 1e-06
    %v1700 = vrcp.pop %v1698
    %v1701 = vrcp.pop %v1699
    %v1702 = vlaneseq
    %v1703 = vshrl.u32 %v1702, 7
    %v1704 = vsub.s32 6, %v1703
    %v1705 = vrot.slane %v45, %v1704
    %v1706 = vmul.f32 %v1705, %v1672
    %v1707 = vmul.f32 %v1705, %v1673
    %v1708 = vmul.f32 %v1706, %v1700
    %v1709 = vmul.f32 %v1707, %v1701
    %v1710 = vlaneseq
    %v1711 = vshrl.u32 %v1710, 7
    %v1712 = vsub.s32 7, %v1711
    %v1713 = vrot.slane %v45, %v1712
    %v1714 = vadd.f32 %v1708, %v1713
    %v1715 = vadd.f32 %v1709, %v1713
    %v1716 = vld [vmem:[%s4] sm:$0xff]
    %v1717 = vld [vmem:[%s4 + $0x8] sm:$0xff]
    %v1718 = vld [vmem:[%s4 + $0x10] sm:$0xff]
    %v1719 = vld [vmem:[%s4 + $0x18] sm:$0xff]
    %v1720 = vlaneseq
    %v1721 = vshrl.u32 %v1720, 7
    %v1722 = vsub.s32 1, %v1721
    %v1723 = vrot.slane %v45, %v1722
    %v1725 = vsel %vm46, %v1714, 0
    %v1728 = vsel %vm46, %v1715, 0
    %1730 = vmatprep.subr.mxu0 0.0
    %1731 = vmatpush1.msra.mxu0 %v1716
    %1732 = vmatprep.subr.mxu0 0.0
    %1733 = vmatpush1.msra.mxu0 %v1717
    %1734 = vmatprep.subr.mxu0 0.0
    %1735 = vmatpush1.msra.mxu0 %v1718
    %1736 = vmatprep.subr.mxu0 0.0
    %1737 = vmatpush1.msra.mxu0 %v1719
    %1738 = vmatprep.subr.mxu0 0.0
    %1739 = vmatpush1.msra.mxu0 0.0
    %1740 = vmatprep.subr.mxu0 0.0
    %1741 = vmatpush1.msra.mxu0 0.0
    %1742 = vmatprep.subr.mxu0 0.0
    %1743 = vmatpush1.msra.mxu0 0.0
    %1744 = vmatprep.subr.mxu0 0.0
    %1745 = vmatpush1.msra.mxu0 0.0
    %1746 = vmatprep.subr.mxu0 0.0
    %1747 = vmatpush1.msra.mxu0 0.0
    %1748 = vmatprep.subr.mxu0 0.0
    %1749 = vmatpush1.msra.mxu0 0.0
    %1750 = vmatprep.subr.mxu0 0.0
    %1751 = vmatpush1.msra.mxu0 0.0
    %1752 = vmatprep.subr.mxu0 0.0
    %1753 = vmatpush1.msra.mxu0 0.0
    %1754 = vmatprep.subr.mxu0 0.0
    %1755 = vmatpush1.msra.mxu0 0.0
    %1756 = vmatprep.subr.mxu0 0.0
    %1757 = vmatpush1.msra.mxu0 0.0
    %1758 = vmatprep.subr.mxu0 0.0
    %1759 = vmatpush1.msra.mxu0 0.0
    %1760 = vmatprep.subr.mxu0 0.0
    %1761 = vmatpush1.msra.mxu0 0.0
    %1762 = vmatprep.subr.mxu0 0.0
    %1763 = vmatpush1.msra.mxu0 0.0
    %1764 = vmatprep.subr.mxu0 0.0
    %1765 = vmatpush1.msra.mxu0 0.0
    %1766 = vmatprep.subr.mxu0 0.0
    %1767 = vmatpush1.msra.mxu0 0.0
    %1768 = vmatprep.subr.mxu0 0.0
    %1769 = vmatpush1.msra.mxu0 0.0
    %1770 = vmatprep.subr.mxu0 0.0
    %1771 = vmatpush1.msra.mxu0 0.0
    %1772 = vmatprep.subr.mxu0 0.0
    %1773 = vmatpush1.msra.mxu0 0.0
    %1774 = vmatprep.subr.mxu0 0.0
    %1775 = vmatpush1.msra.mxu0 0.0
    %1776 = vmatprep.subr.mxu0 0.0
    %1777 = vmatpush1.msra.mxu0 0.0
    %1778 = vmatprep.subr.mxu0 0.0
    %1779 = vmatpush1.msra.mxu0 0.0
    %1780 = vmatprep.subr.mxu0 0.0
    %1781 = vmatpush1.msra.mxu0 0.0
    %1782 = vmatprep.subr.mxu0 0.0
    %1783 = vmatpush1.msra.mxu0 0.0
    %1784 = vmatprep.subr.mxu0 0.0
    %1785 = vmatpush1.msra.mxu0 0.0
    %1786 = vmatprep.subr.mxu0 0.0
    %1787 = vmatpush1.msra.mxu0 0.0
    %1788 = vmatprep.subr.mxu0 0.0
    %1789 = vmatpush1.msra.mxu0 0.0
    %1790 = vmatprep.subr.mxu0 0.0
    %1791 = vmatpush1.msra.mxu0 0.0
    %1792 = vmatprep.subr.mxu0 0.0
    %1793 = vmatpush1.msra.mxu0 0.0
    %1794 = vmatprep.mubr.f32.mxu0 0.0
    %1795 = vmatmul.mubr.f32.gmra.mrb[0].mxu0 %v1725
    %v1796 = vpop.f32.mrb[0].mxu0
    %v1797 = vadd.f32 %v1723, %v1796
    %v1798 = vpop.f32.mrb[0].mxu0
    %1799 = vmatprep.mubr.f32.mxu0 0.0
    %1800 = vmatmul.mubr.f32.gmra.mrb[0].mxu0 %v1728
    %v1801 = vpop.f32.mrb[0].mxu0
    %v1802 = vadd.f32 %v1723, %v1801
    %v1803 = vpop.f32.mrb[0].mxu0
    %1804 = vdwg.mxu0
    %v1805 = vmax.f32 %v1797, 0.0
    %v1806 = vmax.f32 %v1802, 0.0
    %v1807 = vld [vmem:[%s5] sm:$0xff]
    %v1808 = vld [vmem:[%s5 + $0x8] sm:$0xff]
    %v1809 = vld [vmem:[%s5 + $0x10] sm:$0xff]
    %v1810 = vld [vmem:[%s5 + $0x18] sm:$0xff]
    %v1811 = vld [vmem:[%s5 + $0x20] sm:$0xff]
    %v1812 = vld [vmem:[%s5 + $0x28] sm:$0xff]
    %v1813 = vld [vmem:[%s5 + $0x30] sm:$0xff]
    %v1814 = vld [vmem:[%s5 + $0x38] sm:$0xff]
    %v1815 = vlaneseq
    %v1816 = vshrl.u32 %v1815, 7
    %v1817 = vsub.s32 3, %v1816
    %v1818 = vrot.slane %v45, %v1817
    %vm1819 = vcmask 523264
    %v1821 = vsel %vm1819, %v1805, 0
    %v1824 = vsel %vm1819, %v1806, 0
    %1826 = vmatprep.subr.mxu0 0.0
    %1827 = vmatpush1.msra.mxu0 %v1807
    %1828 = vmatprep.subr.mxu0 0.0
    %1829 = vmatpush1.msra.mxu0 %v1808
    %1830 = vmatprep.subr.mxu0 0.0
    %1831 = vmatpush1.msra.mxu0 %v1809
    %1832 = vmatprep.subr.mxu0 0.0
    %1833 = vmatpush1.msra.mxu0 %v1810
    %1834 = vmatprep.subr.mxu0 0.0
    %1835 = vmatpush1.msra.mxu0 %v1811
    %1836 = vmatprep.subr.mxu0 0.0
    %1837 = vmatpush1.msra.mxu0 %v1812
    %1838 = vmatprep.subr.mxu0 0.0
    %1839 = vmatpush1.msra.mxu0 %v1813
    %1840 = vmatprep.subr.mxu0 0.0
    %1841 = vmatpush1.msra.mxu0 %v1814
    %1842 = vmatprep.subr.mxu0 0.0
    %1843 = vmatpush1.msra.mxu0 0.0
    %1844 = vmatprep.subr.mxu0 0.0
    %1845 = vmatpush1.msra.mxu0 0.0
    %1846 = vmatprep.subr.mxu0 0.0
    %1847 = vmatpush1.msra.mxu0 0.0
    %1848 = vmatprep.subr.mxu0 0.0
    %1849 = vmatpush1.msra.mxu0 0.0
    %1850 = vmatprep.subr.mxu0 0.0
    %1851 = vmatpush1.msra.mxu0 0.0
    %1852 = vmatprep.subr.mxu0 0.0
    %1853 = vmatpush1.msra.mxu0 0.0
    %1854 = vmatprep.subr.mxu0 0.0
    %1855 = vmatpush1.msra.mxu0 0.0
    %1856 = vmatprep.subr.mxu0 0.0
    %1857 = vmatpush1.msra.mxu0 0.0
    %1858 = vmatprep.subr.mxu0 0.0
    %1859 = vmatpush1.msra.mxu0 0.0
    %1860 = vmatprep.subr.mxu0 0.0
    %1861 = vmatpush1.msra.mxu0 0.0
    %1862 = vmatprep.subr.mxu0 0.0
    %1863 = vmatpush1.msra.mxu0 0.0
    %1864 = vmatprep.subr.mxu0 0.0
    %1865 = vmatpush1.msra.mxu0 0.0
    %1866 = vmatprep.subr.mxu0 0.0
    %1867 = vmatpush1.msra.mxu0 0.0
    %1868 = vmatprep.subr.mxu0 0.0
    %1869 = vmatpush1.msra.mxu0 0.0
    %1870 = vmatprep.subr.mxu0 0.0
    %1871 = vmatpush1.msra.mxu0 0.0
    %1872 = vmatprep.subr.mxu0 0.0
    %1873 = vmatpush1.msra.mxu0 0.0
    %1874 = vmatprep.subr.mxu0 0.0
    %1875 = vmatpush1.msra.mxu0 0.0
    %1876 = vmatprep.subr.mxu0 0.0
    %1877 = vmatpush1.msra.mxu0 0.0
    %1878 = vmatprep.subr.mxu0 0.0
    %1879 = vmatpush1.msra.mxu0 0.0
    %1880 = vmatprep.subr.mxu0 0.0
    %1881 = vmatpush1.msra.mxu0 0.0
    %1882 = vmatprep.subr.mxu0 0.0
    %1883 = vmatpush1.msra.mxu0 0.0
    %1884 = vmatprep.subr.mxu0 0.0
    %1885 = vmatpush1.msra.mxu0 0.0
    %1886 = vmatprep.subr.mxu0 0.0
    %1887 = vmatpush1.msra.mxu0 0.0
    %1888 = vmatprep.subr.mxu0 0.0
    %1889 = vmatpush1.msra.mxu0 0.0
    %1890 = vmatprep.mubr.f32.mxu0 0.0
    %1891 = vmatmul.mubr.f32.gmra.mrb[0].mxu0 %v1821
    %v1892 = vpop.f32.mrb[0].mxu0
    %v1893 = vadd.f32 %v1818, %v1892
    %v1894 = vpop.f32.mrb[0].mxu0
    %1895 = vmatprep.mubr.f32.mxu0 0.0
    %1896 = vmatmul.mubr.f32.gmra.mrb[0].mxu0 %v1824
    %v1897 = vpop.f32.mrb[0].mxu0
    %v1898 = vadd.f32 %v1818, %v1897
    %v1899 = vpop.f32.mrb[0].mxu0
    %1900 = vdwg.mxu0
    %v1901 = vadd.f32 %v1662, %v1893
    %v1902 = vadd.f32 %v1663, %v1898
    %1903 = vst.msk [vmem:[#allocation6] sm:$0xff] %vm46, %v1901
    %1904 = vst.msk [vmem:[#allocation6 + $0x8] sm:$0xff] %vm46, %v1902
    // Predicated region
    $region34: #{tpu_custom_call.1} parent=1 // pred_check
      _
    $region35: #{tpu_custom_call.1} parent=1 // pred_check_branch
      %1906 = sbr.rel (0) target = $region37
    $region36: #{tpu_custom_call.1} parent=1 // pred_region
      %s1908 = ssub.s32 256, 256
      %1909 = vsyncadd [#allocation5], %s1908
      %s1910 = sshll.u32 [#allocation6], 4
      %s1911 = int_to_ptr.vmem [resolvable:$true] %s1910
      %1916 = dma.vmem_to_hbm [thread:$0]  %s1911, 256, %s7, [#allocation5], 128, 128, 8
    $region37: #{tpu_custom_call.1} parent=1 // pred_fallthru
      _
    // Predicated region
    $region38: #{tpu_custom_call.1} parent=1 // pred_check
      _
    $region39: #{tpu_custom_call.1} parent=1 // pred_check_branch
      %1918 = sbr.rel (0) target = $region41
    $region40: #{tpu_custom_call.1} parent=1 // pred_region
      %1919 = dma.done [#allocation5], 256
    $region41: #{tpu_custom_call.1} parent=1 // pred_fallthru
      _
    %1920 = vsyncpa [#allocation4], 1
    %1921 = vsyncpa [#allocation5], 1

</llo_original>
